<compile_context>
chip_gen: v7x
topology: tpu7x:2x2x1
jax: 0.10.0
libtpu: 0.0.40
codegen_flags: <defaults>
</compile_context>

<pallas_src>
import jax
import jax.numpy as jnp
from jax import lax
from jax.experimental import pallas as pl
from jax.experimental.pallas import tpu as pltpu


def _vmem_limit_bytes():
    """Generation-aware scoped-VMEM limit (review item)."""
    try:
        cap = int(pltpu.get_tpu_info().vmem_capacity_bytes)
        return min(3 * cap // 4, 100 * 1024 * 1024)   # ~96 MiB v5e/v6e, ~48 MiB v7x
    except Exception:
        return 32 * 1024 * 1024                        # safe everywhere


def _upsample_conv_kernel(x_ref, s_ref, w_ref, b_ref, out_ref):
    """One (batch, row-tile) block of: nearest-2x upsample -> 3x3 conv (pad=1).

    x_ref:   (Cin, H+2, W)           original-res input, zero-padded by 1 row
    s_ref:   (W, 3*W2)               0/1 spread: W-upsample + pad, one copy per kx tap
    w_ref:   (2, Cout, 6*Cin)        folded weights per output-row parity, K=(a,kx,cin)
    b_ref:   (Cout, 1)               bias (f32)
    out_ref: (Cout, 2*rows_tile*W2)  flat NCHW output rows for this tile
    """
    cin, _, w_in = x_ref.shape
    w2 = 2 * w_in
    cout, tile_cols = out_ref.shape
    rows = tile_cols // (2 * w2)

    row_start = pl.multiple_of(pl.program_id(1) * rows, rows)

    # Source slab for this tile: `rows` source rows plus a 1-row halo each side.
    slab = x_ref[:, pl.ds(row_start, rows + 2), :]                  # (Cin, rows+2, W)

    # Fused nearest-2x upsample along W + 1-px pad + all 3 kx tap copies:
    # one 0/1-matrix matmul in VMEM, no 4x intermediate in HBM.
    up3 = jnp.dot(slab.reshape(cin * (rows + 2), w_in), s_ref[...],
                  preferred_element_type=slab.dtype)
    up3 = up3.reshape(cin, rows + 2, 3 * w2)                        # (Cin, rows+2, 3*W2)

    # Row-batched sub-pixel conv: one (Cout, 6Cin) @ (6Cin, rows*W2) matmul per
    # output-row parity.  RHS pieces are contiguous lane-aligned slices of up3
    # (tap kx lives at lane offset kx*W2); K order (a, kx, cin) matches w_ref.
    par = []
    for p in range(2):
        pieces = [up3[:, p + a:p + a + rows, kx * w2:(kx + 1) * w2]
                  for a in range(2) for kx in range(3)]             # 6 x (Cin, rows, W2)
        rhs = jnp.concatenate(pieces, axis=0).reshape(6 * cin, rows * w2)
        par.append(jnp.dot(w_ref[p], rhs,
                           preferred_element_type=jnp.float32))     # (Cout, rows*W2)

    # Interleave even/odd output rows, add bias once to the whole slab, and do
    # a single wide lane-dense store (2*rows*W2 lanes).
    even = par[0].reshape(cout, rows, w2)
    odd = par[1].reshape(cout, rows, w2)
    tile = jnp.concatenate([even, odd], axis=2).reshape(cout, 2 * rows * w2)
    tile = tile + b_ref[...]                                        # (Cout, 1) broadcast
    out_ref[...] = tile.astype(out_ref.dtype)


def upsample_forward(x_nchw, weight_oihw, bias, *, rows_tile=8, compute_dtype=None):
    """Equivalent of Upsample.forward: nearest 2x upsample then 3x3 conv, pad=1.

    x_nchw:      (N, Cin, H, W)
    weight_oihw: (Cout, Cin, 3, 3)   (PyTorch layout)
    bias:        (Cout,)
    compute_dtype: optional matmul operand dtype (e.g. jnp.bfloat16 for
                   production channel counts on v6e/v7x); accumulation is f32.
    returns      (N, Cout, 2H, 2W)
    """
    N, Cin, H, W = x_nchw.shape
    Cout = weight_oihw.shape[0]
    H2, W2 = 2 * H, 2 * W
    out_dtype = x_nchw.dtype
    cdt = compute_dtype if compute_dtype is not None else x_nchw.dtype

    # Largest divisor of H not exceeding the request: never silently grows to
    # a whole-image block (VMEM cliff), never needs masking of a ragged tile.
    rows_tile = max(1, min(rows_tile, H))
    while H % rows_tile:
        rows_tile -= 1
    n_tiles = H // rows_tile

    # Only XLA-side activation prep: 1-row zero pad of the ORIGINAL-resolution
    # input (the 2x-upsampled 4x-sized tensor is never materialized in HBM).
    x_pad = jnp.pad(x_nchw, ((0, 0), (0, 0), (1, 1), (0, 0))).astype(cdt)

    # Spread matrix with the 3 kx column taps folded in: tap kx, output col c
    # reads padded upsampled column m = c + kx, i.e. source column (m-1)//2
    # when 1 <= m <= W2 and exact zero otherwise.
    out_cols = jnp.arange(W2)
    src_cols = jnp.arange(W)[:, None]
    taps = []
    for kx in range(3):
        m = out_cols + kx
        valid = (m >= 1) & (m <= W2)
        src = (m - 1) // 2
        taps.append(((src_cols == src[None, :]) & valid[None, :]).astype(cdt))
    spread3 = jnp.concatenate(taps, axis=1)                          # (W, 3*W2)

    # Fold the 3 row taps into 2 taps per output-row parity:
    #   parity 0 reads source rows (y-1, y); parity 1 reads (y, y+1).
    sel = jnp.array([[[1, 0, 0], [0, 1, 1]],
                     [[1, 1, 0], [0, 0, 1]]], dtype=jnp.float32)     # (p, a, ky)
    wmat = jnp.einsum("pay,ocyx->poaxc", sel, weight_oihw.astype(jnp.float32))
    wmat = wmat.reshape(2, Cout, 6 * Cin).astype(cdt)                # K = (a, kx, cin)
    bias_col = bias.astype(jnp.float32).reshape(Cout, 1)

    out_flat = pl.pallas_call(
        _upsample_conv_kernel,
        out_shape=jax.ShapeDtypeStruct((N, Cout, H2 * W2), out_dtype),
        grid_spec=pltpu.PrefetchScalarGridSpec(
            num_scalar_prefetch=0,
            grid=(N, n_tiles),
            in_specs=[
                pl.BlockSpec((None, Cin, H + 2, W), lambda b, i: (b, 0, 0, 0)),
                pl.BlockSpec((W, 3 * W2), lambda b, i: (0, 0)),
                pl.BlockSpec((2, Cout, 6 * Cin), lambda b, i: (0, 0, 0)),
                pl.BlockSpec((Cout, 1), lambda b, i: (0, 0)),
            ],
            out_specs=pl.BlockSpec((None, Cout, 2 * rows_tile * W2),
                                   lambda b, i: (b, 0, i)),
        ),
        compiler_params=pltpu.CompilerParams(
            dimension_semantics=("parallel", "parallel"),
            vmem_limit_bytes=_vmem_limit_bytes()),
    )(x_pad, spread3, wmat, bias_col)

    # Metadata-only reshape of the flat, lane-dense NCHW output.
    return out_flat.reshape(N, Cout, H2, W2)


def _reference_forward(x_nchw, weight_oihw, bias):
    x_up = jnp.repeat(jnp.repeat(x_nchw, 2, axis=2), 2, axis=3)
    out = lax.conv_general_dilated(
        x_up, weight_oihw, window_strides=(1, 1), padding=((1, 1), (1, 1)),
        dimension_numbers=("NCHW", "OIHW", "NCHW"))
    return out + bias.reshape(1, -1, 1, 1)


if __name__ == "__main__":
    key = jax.random.PRNGKey(0)
    kx, kw, kb = jax.random.split(key, 3)

    N, Cin, H, W = 2, 4, 16, 16
    Cout = 8

    x = jax.random.normal(kx, (N, Cin, H, W), dtype=jnp.float32)

    # Deterministic parameter init (shapes match torch.nn.Conv2d(Cin, Cout, 3, padding=1)).
    fan_in = Cin * 3 * 3
    bound = 1.0 / (fan_in ** 0.5)
    weight = jax.random.uniform(kw, (Cout, Cin, 3, 3), jnp.float32, -bound, bound)
    bias = jax.random.uniform(kb, (Cout,), jnp.float32, -bound, bound)

    out = jax.block_until_ready(upsample_forward(x, weight, bias))
    ref = jax.block_until_ready(_reference_forward(x, weight, bias))

    assert out.shape == (N, Cout, 2 * H, 2 * W), out.shape
    err = float(jnp.max(jnp.abs(out - ref)))
    assert jnp.allclose(out, ref, atol=1e-4, rtol=1e-4), err

    print("KERNEL_OK")
</pallas_src>

<mosaic_0001>
module attributes {stable_mosaic.version = 11 : i64} {
  func.func @_upsample_conv_kernel(%arg0: i32, %arg1: i32, %arg2: memref<1x4x18x16xf32, #tpu.memory_space<vmem>>, %arg3: memref<16x96xf32, #tpu.memory_space<vmem>>, %arg4: memref<2x8x24xf32, #tpu.memory_space<vmem>>, %arg5: memref<8x1xf32, #tpu.memory_space<vmem>>, %arg6: memref<1x8x512xf32, #tpu.memory_space<vmem>>) attributes {dimension_semantics = [#tpu.dimension_semantics<parallel>, #tpu.dimension_semantics<parallel>], iteration_bounds = array<i64: 2, 2>, scalar_prefetch = 0 : i64, scratch_operands = 0 : i64, tpu.core_type = #tpu.core_type<tc>, window_params = [{transform_indices = @transform_0, window_bounds = array<i64: 1, 4, 18, 16>}, {pipeline_mode = #tpu.pipeline_mode<synchronous>, transform_indices = @transform_1, window_bounds = array<i64: 16, 96>}, {pipeline_mode = #tpu.pipeline_mode<synchronous>, transform_indices = @transform_2, window_bounds = array<i64: 2, 8, 24>}, {pipeline_mode = #tpu.pipeline_mode<synchronous>, transform_indices = @transform_3, window_bounds = array<i64: 8, 1>}, {transform_indices = @transform_4, window_bounds = array<i64: 1, 8, 512>}]} {
    %c8_i32 = arith.constant 8 : i32
    %0 = arith.muli %arg1, %c8_i32 : i32
    %1 = tpu.assume_multiple %0, 8 : i32
    %c0 = arith.constant 0 : index
    %c0_0 = arith.constant 0 : index
    %2 = arith.index_cast %1 : i32 to index
    %c0_1 = arith.constant 0 : index
    %3 = vector.load %arg2[%c0, %c0_0, %2, %c0_1] : memref<1x4x18x16xf32, #tpu.memory_space<vmem>>, vector<1x4x10x16xf32>
    %4 = vector.shape_cast %3 : vector<1x4x10x16xf32> to vector<4x10x16xf32>
    %5 = vector.shape_cast %4 : vector<4x10x16xf32> to vector<40x16xf32>
    %c0_2 = arith.constant 0 : index
    %c0_3 = arith.constant 0 : index
    %6 = vector.load %arg3[%c0_2, %c0_3] : memref<16x96xf32, #tpu.memory_space<vmem>>, vector<16x96xf32>
    %cst = arith.constant dense<0.000000e+00> : vector<40x96xf32>
    %7 = tpu.matmul %5, %6, %cst {dimension_numbers = #tpu.dot_dimension_numbers<[1], [0], [0], [1], [0, 0, 1, 1], [], []>} : vector<40x16xf32>, vector<16x96xf32>, vector<40x96xf32> -> vector<40x96xf32>
    %8 = vector.shape_cast %7 : vector<40x96xf32> to vector<4x10x96xf32>
    %9 = vector.extract_strided_slice %8 {offsets = [0, 0, 0], sizes = [4, 8, 32], strides = [1, 1, 1]} : vector<4x10x96xf32> to vector<4x8x32xf32>
    %10 = vector.extract_strided_slice %8 {offsets = [0, 0, 32], sizes = [4, 8, 32], strides = [1, 1, 1]} : vector<4x10x96xf32> to vector<4x8x32xf32>
    %11 = vector.extract_strided_slice %8 {offsets = [0, 0, 64], sizes = [4, 8, 32], strides = [1, 1, 1]} : vector<4x10x96xf32> to vector<4x8x32xf32>
    %12 = vector.extract_strided_slice %8 {offsets = [0, 1, 0], sizes = [4, 8, 32], strides = [1, 1, 1]} : vector<4x10x96xf32> to vector<4x8x32xf32>
    %13 = vector.extract_strided_slice %8 {offsets = [0, 1, 32], sizes = [4, 8, 32], strides = [1, 1, 1]} : vector<4x10x96xf32> to vector<4x8x32xf32>
    %14 = vector.extract_strided_slice %8 {offsets = [0, 1, 64], sizes = [4, 8, 32], strides = [1, 1, 1]} : vector<4x10x96xf32> to vector<4x8x32xf32>
    %15 = tpu.concatenate %9, %10, %11, %12, %13, %14 in 0 : vector<4x8x32xf32>, vector<4x8x32xf32>, vector<4x8x32xf32>, vector<4x8x32xf32>, vector<4x8x32xf32>, vector<4x8x32xf32> -> vector<24x8x32xf32>
    %16 = vector.shape_cast %15 : vector<24x8x32xf32> to vector<24x256xf32>
    %c0_4 = arith.constant 0 : index
    %c0_5 = arith.constant 0 : index
    %c0_6 = arith.constant 0 : index
    %17 = vector.load %arg4[%c0_4, %c0_5, %c0_6] : memref<2x8x24xf32, #tpu.memory_space<vmem>>, vector<1x8x24xf32>
    %18 = vector.shape_cast %17 : vector<1x8x24xf32> to vector<8x24xf32>
    %cst_7 = arith.constant dense<0.000000e+00> : vector<8x256xf32>
    %19 = tpu.matmul %18, %16, %cst_7 {dimension_numbers = #tpu.dot_dimension_numbers<[1], [0], [0], [1], [0, 0, 1, 1], [], []>} : vector<8x24xf32>, vector<24x256xf32>, vector<8x256xf32> -> vector<8x256xf32>
    %20 = vector.extract_strided_slice %8 {offsets = [0, 1, 0], sizes = [4, 8, 32], strides = [1, 1, 1]} : vector<4x10x96xf32> to vector<4x8x32xf32>
    %21 = vector.extract_strided_slice %8 {offsets = [0, 1, 32], sizes = [4, 8, 32], strides = [1, 1, 1]} : vector<4x10x96xf32> to vector<4x8x32xf32>
    %22 = vector.extract_strided_slice %8 {offsets = [0, 1, 64], sizes = [4, 8, 32], strides = [1, 1, 1]} : vector<4x10x96xf32> to vector<4x8x32xf32>
    %23 = vector.extract_strided_slice %8 {offsets = [0, 2, 0], sizes = [4, 8, 32], strides = [1, 1, 1]} : vector<4x10x96xf32> to vector<4x8x32xf32>
    %24 = vector.extract_strided_slice %8 {offsets = [0, 2, 32], sizes = [4, 8, 32], strides = [1, 1, 1]} : vector<4x10x96xf32> to vector<4x8x32xf32>
    %25 = vector.extract_strided_slice %8 {offsets = [0, 2, 64], sizes = [4, 8, 32], strides = [1, 1, 1]} : vector<4x10x96xf32> to vector<4x8x32xf32>
    %26 = tpu.concatenate %20, %21, %22, %23, %24, %25 in 0 : vector<4x8x32xf32>, vector<4x8x32xf32>, vector<4x8x32xf32>, vector<4x8x32xf32>, vector<4x8x32xf32>, vector<4x8x32xf32> -> vector<24x8x32xf32>
    %27 = vector.shape_cast %26 : vector<24x8x32xf32> to vector<24x256xf32>
    %c1 = arith.constant 1 : index
    %c0_8 = arith.constant 0 : index
    %c0_9 = arith.constant 0 : index
    %28 = vector.load %arg4[%c1, %c0_8, %c0_9] : memref<2x8x24xf32, #tpu.memory_space<vmem>>, vector<1x8x24xf32>
    %29 = vector.shape_cast %28 : vector<1x8x24xf32> to vector<8x24xf32>
    %cst_10 = arith.constant dense<0.000000e+00> : vector<8x256xf32>
    %30 = tpu.matmul %29, %27, %cst_10 {dimension_numbers = #tpu.dot_dimension_numbers<[1], [0], [0], [1], [0, 0, 1, 1], [], []>} : vector<8x24xf32>, vector<24x256xf32>, vector<8x256xf32> -> vector<8x256xf32>
    %31 = vector.shape_cast %19 : vector<8x256xf32> to vector<8x8x32xf32>
    %32 = vector.shape_cast %30 : vector<8x256xf32> to vector<8x8x32xf32>
    %33 = tpu.concatenate %31, %32 in 2 : vector<8x8x32xf32>, vector<8x8x32xf32> -> vector<8x8x64xf32>
    %34 = vector.shape_cast %33 : vector<8x8x64xf32> to vector<8x512xf32>
    %c0_11 = arith.constant 0 : index
    %c0_12 = arith.constant 0 : index
    %35 = vector.load %arg5[%c0_11, %c0_12] : memref<8x1xf32, #tpu.memory_space<vmem>>, vector<8x1xf32>
    %36 = vector.broadcast %35 : vector<8x1xf32> to vector<8x512xf32>
    %37 = arith.addf %34, %36 : vector<8x512xf32>
    %c0_13 = arith.constant 0 : index
    %c0_14 = arith.constant 0 : index
    %c0_15 = arith.constant 0 : index
    %38 = vector.load %arg6[%c0_13, %c0_14, %c0_15] : memref<1x8x512xf32, #tpu.memory_space<vmem>>, vector<1x8x512xf32>
    %39 = vector.shape_cast %38 : vector<1x8x512xf32> to vector<8x512xf32>
    %40 = vector.shape_cast %37 : vector<8x512xf32> to vector<1x8x512xf32>
    tpu.vector_store %arg6[%c0_13, %c0_14, %c0_15], %40 {strides = array<i32>} : memref<1x8x512xf32, #tpu.memory_space<vmem>>, vector<1x8x512xf32>,
    return
  }
  func.func @transform_0(%arg0: i32, %arg1: i32) -> (i32, i32, i32, i32) {
    %c0_i32 = arith.constant 0 : i32
    %c0_i32_0 = arith.constant 0 : i32
    %c0_i32_1 = arith.constant 0 : i32
    %c0_i32_2 = arith.constant 0 : i32
    return %arg0, %c0_i32, %c0_i32_0, %c0_i32_1 : i32, i32, i32, i32
  }
  func.func @transform_1(%arg0: i32, %arg1: i32) -> (i32, i32) {
    %c0_i32 = arith.constant 0 : i32
    %c0_i32_0 = arith.constant 0 : i32
    %c0_i32_1 = arith.constant 0 : i32
    return %c0_i32, %c0_i32_0 : i32, i32
  }
  func.func @transform_2(%arg0: i32, %arg1: i32) -> (i32, i32, i32) {
    %c0_i32 = arith.constant 0 : i32
    %c0_i32_0 = arith.constant 0 : i32
    %c0_i32_1 = arith.constant 0 : i32
    %c0_i32_2 = arith.constant 0 : i32
    return %c0_i32, %c0_i32_0, %c0_i32_1 : i32, i32, i32
  }
  func.func @transform_3(%arg0: i32, %arg1: i32) -> (i32, i32) {
    %c0_i32 = arith.constant 0 : i32
    %c0_i32_0 = arith.constant 0 : i32
    %c0_i32_1 = arith.constant 0 : i32
    return %c0_i32, %c0_i32_0 : i32, i32
  }
  func.func @transform_4(%arg0: i32, %arg1: i32) -> (i32, i32, i32) {
    %c0_i32 = arith.constant 0 : i32
    %c0_i32_0 = arith.constant 0 : i32
    return %arg0, %c0_i32, %arg1 : i32, i32, i32
  }
}

</mosaic_0001>

<llo_original>
// kernel: tpu_custom_call.1
$region0: #{tpu_custom_call.1}
  #allocation0 [shape = 'u32[]', space=smem, size = 0x4, offset = 0x4, fixed_abs, tag = 'smem constant byte address 0x4 - core index']
  #allocation1 [shape = 'u32[144,128]{1,0:T(1,128)}', space=vmem, size = 0x12000, scoped, tag = 'internal scratch']
  %s0 = inlined_call_operand.vmem [shape: f32[2,4,18,16], index: 0, kind: input, shape index: {}]
  %s1 = inlined_call_operand.vmem [shape: f32[16,96], index: 1, kind: input, shape index: {}]
  %s2 = inlined_call_operand.vmem [shape: f32[2,8,24], index: 2, kind: input, shape index: {}]
  %s3 = inlined_call_operand.vmem [shape: f32[8,1], index: 3, kind: input, shape index: {}]
  %s4 = inlined_call_operand.hbm [shape: f32[2,8,1024], index: 4, kind: output, shape index: {}]
  %s5 = sld [smem:[#allocation0]]
  $region49: #{tpu_custom_call.1} parent=0
    _
  %s7 = ssub.s32 1, %s5
  %s8 = scalar_select 0, %s7, %s5
  $region1: #{tpu_custom_call.1} parent=0
    #allocation2 [shape = 'u8[32768]{0}', space=vmem, size = 0x8000, scoped, tag = 'output window, operand 0']
    #allocation3 [shape = 's32[2]{0}', space=sflag, size = 0x8, scoped, tag = 'scoped memory for tpu_custom_call.1']
    %9 = vsyncpa [#allocation3], 0
    %s10 = scalar_lea.sflag [#allocation3], 1
    %11 = vsyncpa %s10, 0
    loop: start=0, step=1, limit=6
    $region2: #{tpu_custom_call.1} parent=1 // loop_pre_header
      _
    $region3: #{tpu_custom_call.1} parent=1 // loop_header
      %s13 = sphi 0, %s17
      %p14 = scmp.ge.s32.totalorder %s13, 6
      %s20 = sphi 0, %s32
      %s21 = sphi 0, %s28
      %s22 = sphi 0, %s20
      %s23 = sphi 0, %s21
      %s24 = sphi 0, %s22
      %s25 = sphi 0, %s23
      %s35 = sphi 0, %s37
      %s38 = sphi 0, %s35
      %s39 = sphi 0, %s38
      %s55 = sphi 0, %s39
      %s59 = sphi 0, %s59
      %s61 = sphi 0, %s59
      %s62 = sphi 0, %s61
      %s76 = sphi 0, %s62
      %s80 = sphi 0, %s80
      %s82 = sphi 0, %s80
      %s83 = sphi 0, %s82
      %s97 = sphi 0, %s83
      %s101 = sphi 0, %s101
      %s103 = sphi 0, %s101
      %s104 = sphi 0, %s103
      %s118 = sphi 0, %s104
      %s126 = sphi 0, %s128
      %s129 = sphi 0, %s126
      %s130 = sphi 0, %s129
      %s146 = sphi 0, %s130
    $region4: #{tpu_custom_call.1} parent=1 // loop_header_branch
      %16 = sbr.rel (%p14) target = $region8
    $region5: #{tpu_custom_call.1} parent=1 // loop_body
      %s18 = ssub.s32 %s13, 1
      %s19 = ssub.s32 %s13, 2
      %s26 = sadd.s32 1, %s21
      %p27 = scmp.ge.s32.totalorder %s26, 2
      %s28 = scalar_select %p27, 0, %s26
      %s29 = sadd.s32 1, %s20
      %s30 = scalar_select %p27, %s29, %s20
      %p31 = scmp.ge.s32.totalorder %s30, 2
      %s32 = scalar_select %p31, 0, %s30
      %s33 = ssub.s32 %s20, %s32
      %p34 = scmp.eq.s32.totalorder %s33, 0
      %s36 = sadd.s32 %s35, 1
      %s37 = scalar_select %p34, %s35, %s36
      %p40 = pneg %p34
      %p41 = scmp.eq.s32.totalorder %s13, 3
      %p42 = por %p40, %p41
      %p43 = scmp.ne.s32.totalorder %s35, %s38
      %p44 = scmp.eq.s32.totalorder %s13, 0
      %p45 = por %p43, %p44
      %p46 = scmp.ne.s32.totalorder %s35, %s38
      %p47 = scmp.eq.s32.totalorder %s18, 3
      %p48 = por %p46, %p47
      %p49 = scmp.ne.s32.totalorder %s38, %s39
      %p50 = scmp.eq.s32.totalorder %s18, 0
      %p51 = por %p49, %p50
      %p52 = scmp.ne.s32.totalorder %s38, %s39
      %p53 = scmp.eq.s32.totalorder %s19, 3
      %p54 = por %p52, %p53
      %p56 = scmp.ne.s32.totalorder %s39, %s55
      %p57 = scmp.eq.s32.totalorder %s19, 0
      %p58 = por %p56, %p57
      %s60 = sadd.s32 %s59, 1
      %p63 = scmp.eq.s32.totalorder %s13, 3
      %p64 = scmp.ne.s32.totalorder %s59, %s61
      %p65 = scmp.eq.s32.totalorder %s13, 0
      %p66 = por %p64, %p65
      %p67 = scmp.ne.s32.totalorder %s59, %s61
      %p68 = scmp.eq.s32.totalorder %s18, 3
      %p69 = por %p67, %p68
      %p70 = scmp.ne.s32.totalorder %s61, %s62
      %p71 = scmp.eq.s32.totalorder %s18, 0
      %p72 = por %p70, %p71
      %p73 = scmp.ne.s32.totalorder %s61, %s62
      %p74 = scmp.eq.s32.totalorder %s19, 3
      %p75 = por %p73, %p74
      %p77 = scmp.ne.s32.totalorder %s62, %s76
      %p78 = scmp.eq.s32.totalorder %s19, 0
      %p79 = por %p77, %p78
      %s81 = sadd.s32 %s80, 1
      %p84 = scmp.eq.s32.totalorder %s13, 3
      %p85 = scmp.ne.s32.totalorder %s80, %s82
      %p86 = scmp.eq.s32.totalorder %s13, 0
      %p87 = por %p85, %p86
      %p88 = scmp.ne.s32.totalorder %s80, %s82
      %p89 = scmp.eq.s32.totalorder %s18, 3
      %p90 = por %p88, %p89
      %p91 = scmp.ne.s32.totalorder %s82, %s83
      %p92 = scmp.eq.s32.totalorder %s18, 0
      %p93 = por %p91, %p92
      %p94 = scmp.ne.s32.totalorder %s82, %s83
      %p95 = scmp.eq.s32.totalorder %s19, 3
      %p96 = por %p94, %p95
      %p98 = scmp.ne.s32.totalorder %s83, %s97
      %p99 = scmp.eq.s32.totalorder %s19, 0
      %p100 = por %p98, %p99
      %s102 = sadd.s32 %s101, 1
      %p105 = scmp.eq.s32.totalorder %s13, 3
      %p106 = scmp.ne.s32.totalorder %s101, %s103
      %p107 = scmp.eq.s32.totalorder %s13, 0
      %p108 = por %p106, %p107
      %p109 = scmp.ne.s32.totalorder %s101, %s103
      %p110 = scmp.eq.s32.totalorder %s18, 3
      %p111 = por %p109, %p110
      %p112 = scmp.ne.s32.totalorder %s103, %s104
      %p113 = scmp.eq.s32.totalorder %s18, 0
      %p114 = por %p112, %p113
      %p115 = scmp.ne.s32.totalorder %s103, %s104
      %p116 = scmp.eq.s32.totalorder %s19, 3
      %p117 = por %p115, %p116
      %p119 = scmp.ne.s32.totalorder %s104, %s118
      %p120 = scmp.eq.s32.totalorder %s19, 0
      %p121 = por %p119, %p120
      %s122 = ssub.s32 %s20, %s32
      %s123 = ssub.s32 %s21, %s28
      %s124 = sor.u32 %s122, %s123
      %p125 = scmp.eq.s32.totalorder %s124, 0
      %s127 = sadd.s32 %s126, 1
      %s128 = scalar_select %p125, %s126, %s127
      %p131 = pneg %p125
      %p132 = scmp.eq.s32.totalorder %s13, 3
      %p133 = por %p131, %p132
      %p134 = scmp.ne.s32.totalorder %s126, %s129
      %p135 = scmp.eq.s32.totalorder %s13, 0
      %p136 = por %p134, %p135
      %p137 = scmp.ne.s32.totalorder %s126, %s129
      %p138 = scmp.eq.s32.totalorder %s18, 3
      %p139 = por %p137, %p138
      %p140 = scmp.ne.s32.totalorder %s129, %s130
      %p141 = scmp.eq.s32.totalorder %s18, 0
      %p142 = por %p140, %p141
      %p143 = scmp.ne.s32.totalorder %s129, %s130
      %p144 = scmp.eq.s32.totalorder %s19, 3
      %p145 = por %p143, %p144
      %p147 = scmp.ne.s32.totalorder %s130, %s146
      %p148 = scmp.eq.s32.totalorder %s19, 0
      %p149 = por %p147, %p148
      %p150 = scmp.le.s32.totalorder 1, %s13
      %p151 = scmp.lt.s32.totalorder %s13, 5
      %p152 = pnand %p150, %p151
      %p153 = pneg %p152
      // Predicated region
      $region9: #{tpu_custom_call.1} parent=5 // pred_check
        _
      $region10: #{tpu_custom_call.1} parent=5 // pred_check_branch
        %155 = sbr.rel (%p152) target = $region12
      $region11: #{tpu_custom_call.1} parent=5 // pred_region
        %s156 = ssub.s32 %s13, 1
        // Predicated region
        $region13: #{tpu_custom_call.1} parent=11 // pred_check
          %p157 = pneg %p72
        $region14: #{tpu_custom_call.1} parent=11 // pred_check_branch
          %159 = sbr.rel (%p157) target = $region16
        $region15: #{tpu_custom_call.1} parent=11 // pred_region
          _
        $region16: #{tpu_custom_call.1} parent=11 // pred_fallthru
          _
        // Predicated region
        $region17: #{tpu_custom_call.1} parent=11 // pred_check
          %p160 = pneg %p93
        $region18: #{tpu_custom_call.1} parent=11 // pred_check_branch
          %162 = sbr.rel (%p160) target = $region20
        $region19: #{tpu_custom_call.1} parent=11 // pred_region
          _
        $region20: #{tpu_custom_call.1} parent=11 // pred_fallthru
          _
        // Predicated region
        $region21: #{tpu_custom_call.1} parent=11 // pred_check
          %p163 = pneg %p114
        $region22: #{tpu_custom_call.1} parent=11 // pred_check_branch
          %165 = sbr.rel (%p163) target = $region24
        $region23: #{tpu_custom_call.1} parent=11 // pred_region
          _
        $region24: #{tpu_custom_call.1} parent=11 // pred_fallthru
          _
      $region12: #{tpu_custom_call.1} parent=5 // pred_fallthru
        _
      %p166 = scmp.lt.s32.totalorder %s13, 4
      // Predicated region
      $region25: #{tpu_custom_call.1} parent=5 // pred_check
        %p167 = pneg %p166
      $region26: #{tpu_custom_call.1} parent=5 // pred_check_branch
        %169 = sbr.rel (%p167) target = $region28
      $region27: #{tpu_custom_call.1} parent=5 // pred_region
        // Predicated region
        $region29: #{tpu_custom_call.1} parent=27 // pred_check
          %p170 = pneg %p45
        $region30: #{tpu_custom_call.1} parent=27 // pred_check_branch
          %172 = sbr.rel (%p170) target = $region32
        $region31: #{tpu_custom_call.1} parent=27 // pred_region
          %p173 = scmp.lt.s32.totalorder %s20, 1
          %s174 = scalar_select %p173, %s20, 1
          %s175 = smul.addr %s174, 12
          %s176 = smul.addr %s175, 8
          %s177 = scalar_lea.vmem %s0, %s176
        $region32: #{tpu_custom_call.1} parent=27 // pred_fallthru
          _
      $region28: #{tpu_custom_call.1} parent=5 // pred_fallthru
        _
      %p178 = scmp.le.s32.totalorder 1, %s13
      %p179 = scmp.lt.s32.totalorder %s13, 5
      %p180 = pnand %p178, %p179
      %p181 = pneg %p180
      // Predicated region
      $region33: #{tpu_custom_call.1} parent=5 // pred_check
        _
      $region34: #{tpu_custom_call.1} parent=5 // pred_check_branch
        %183 = sbr.rel (%p180) target = $region36
      $region35: #{tpu_custom_call.1} parent=5 // pred_region
        %s184 = ssub.s32 %s13, 1
        %p185 = scmp.lt.s32.totalorder %s22, 1
        %s186 = scalar_select %p185, %s22, 1
        %s187 = smul.addr %s186, 12
        %s188 = smul.addr %s187, 8
        %s189 = scalar_lea.vmem %s0, %s188
        %p190 = pneg %p51
        %p191 = pneg %p48
        %p192 = pneg %p72
        %p193 = pneg %p69
        %p194 = pneg %p93
        %p195 = pneg %p90
        %p196 = pneg %p114
        %p197 = pneg %p111
        %p198 = pneg %p142
        %p199 = pneg %p139
        %s200 = sand.u32 %s129, 1
        %s201 = scalar_lea.sflag [#allocation3], %s200
        %s202 = sand.u32 %s129, 1
        %s203 = smul.addr %s202, 32
        %s204 = scalar_lea.vmem [#allocation2], %s203
        %p205 = scmp.lt.s32.totalorder %s22, 1
        %s206 = scalar_select %p205, %s22, 1
        %s207 = smul.addr %s206, 12
        %s208 = smul.addr %s207, 8
        %s209 = scalar_lea.vmem %s0, %s208
        %s210 = smul.u32 4, %s23
        %s211 = smul.u32 %s23, 8
        %s212 = scalar_lea.vmem %s209, %s211
        %v213 = vld [vmem:[%s212] sm:$0xff]
        %v214 = vld [vmem:[%s212 + $0x8] sm:$0x3]
        %v215 = vld [vmem:[%s212 + $0x18] sm:$0xff]
        %v216 = vld [vmem:[%s212 + $0x20] sm:$0x3]
        %v217 = vld [vmem:[%s212 + $0x30] sm:$0xff]
        %v218 = vld [vmem:[%s212 + $0x38] sm:$0x3]
        %v219 = vld [vmem:[%s212 + $0x48] sm:$0xff]
        %v220 = vld [vmem:[%s212 + $0x50] sm:$0x3]
        %v229 = vcombine.high %v213, %v213
        %v231 = vunpack.c.l.s4 1983009808
        %v232 = vunpack.c.0.s8 %v231
        %v233 = vlaneseq
        %v234 = vshrl.u32 %v233, 7
        %v235 = vsub.s32 %v232, %v234
        %v236 = vrot.slane %v213, %v235
        %v238 = vunpack.c.l.s4 1983009808
        %v239 = vunpack.c.0.s8 %v238
        %v240 = vlaneseq
        %v241 = vshrl.u32 %v240, 7
        %v242 = vsub.s32 %v239, %v241
        %v243 = vrot.slane %v229, %v242
        %v244 = vcombine.high %v236, %v236
        %v245 = vcombine.high %v243, %v243
        %v247 = vunpack.c.l.s4 1983009808
        %v248 = vunpack.c.0.s8 %v247
        %v249 = vlaneseq
        %v250 = vshrl.u32 %v249, 7
        %v251 = vsub.s32 %v248, %v250
        %v252 = vrot.slane %v214, %v251
        %v253 = vcombine.high %v215, %v215
        %v255 = vunpack.c.l.s4 1983009808
        %v256 = vunpack.c.0.s8 %v255
        %v257 = vlaneseq
        %v258 = vshrl.u32 %v257, 7
        %v259 = vsub.s32 %v256, %v258
        %v260 = vrot.slane %v215, %v259
        %v262 = vunpack.c.l.s4 1983009808
        %v263 = vunpack.c.0.s8 %v262
        %v264 = vlaneseq
        %v265 = vshrl.u32 %v264, 7
        %v266 = vsub.s32 %v263, %v265
        %v267 = vrot.slane %v253, %v266
        %v268 = vcombine.high %v260, %v260
        %v269 = vcombine.high %v267, %v267
        %v271 = vunpack.c.l.s4 1983009808
        %v272 = vunpack.c.0.s8 %v271
        %v273 = vlaneseq
        %v274 = vshrl.u32 %v273, 7
        %v275 = vsub.s32 %v272, %v274
        %v276 = vrot.slane %v216, %v275
        %v277 = vcombine.high %v217, %v217
        %v279 = vunpack.c.l.s4 1983009808
        %v280 = vunpack.c.0.s8 %v279
        %v281 = vlaneseq
        %v282 = vshrl.u32 %v281, 7
        %v283 = vsub.s32 %v280, %v282
        %v284 = vrot.slane %v217, %v283
        %v286 = vunpack.c.l.s4 1983009808
        %v287 = vunpack.c.0.s8 %v286
        %v288 = vlaneseq
        %v289 = vshrl.u32 %v288, 7
        %v290 = vsub.s32 %v287, %v289
        %v291 = vrot.slane %v277, %v290
        %v292 = vcombine.high %v284, %v284
        %v293 = vcombine.high %v291, %v291
        %v295 = vunpack.c.l.s4 1983009808
        %v296 = vunpack.c.0.s8 %v295
        %v297 = vlaneseq
        %v298 = vshrl.u32 %v297, 7
        %v299 = vsub.s32 %v296, %v298
        %v300 = vrot.slane %v218, %v299
        %v301 = vcombine.high %v219, %v219
        %v303 = vunpack.c.l.s4 1983009808
        %v304 = vunpack.c.0.s8 %v303
        %v305 = vlaneseq
        %v306 = vshrl.u32 %v305, 7
        %v307 = vsub.s32 %v304, %v306
        %v308 = vrot.slane %v219, %v307
        %v310 = vunpack.c.l.s4 1983009808
        %v311 = vunpack.c.0.s8 %v310
        %v312 = vlaneseq
        %v313 = vshrl.u32 %v312, 7
        %v314 = vsub.s32 %v311, %v313
        %v315 = vrot.slane %v301, %v314
        %v316 = vcombine.high %v308, %v308
        %v317 = vcombine.high %v315, %v315
        %v319 = vunpack.c.l.s4 1983009808
        %v320 = vunpack.c.0.s8 %v319
        %v321 = vlaneseq
        %v322 = vshrl.u32 %v321, 7
        %v323 = vsub.s32 %v320, %v322
        %v324 = vrot.slane %v220, %v323
        %v325 = vld [vmem:[%s1] sm:$0xff]
        %v326 = vld [vmem:[%s1 + $0x8] sm:$0xff]
        %v327 = vcombine.low %v236, %v244
        %v328 = vcombine.low %v243, %v245
        %v330 = vunpack.c.l.s4 1983009808
        %v331 = vunpack.c.0.s8 %v330
        %v332 = vlaneseq
        %v333 = vshrl.u32 %v332, 7
        %v334 = vsub.s32 %v331, %v333
        %v335 = vrot.slane %v327, %v334
        %v337 = vunpack.c.l.s4 1983009808
        %v338 = vunpack.c.0.s8 %v337
        %v339 = vlaneseq
        %v340 = vshrl.u32 %v339, 7
        %v341 = vsub.s32 %v338, %v340
        %v342 = vrot.slane %v328, %v341
        %v343 = vcombine.low %v335, %v342
        %v344 = vcombine.low %v252, %v260
        %v345 = vcombine.low %v268, %v267
        %v347 = vunpack.c.l.s4 1983009808
        %v348 = vunpack.c.0.s8 %v347
        %v349 = vlaneseq
        %v350 = vshrl.u32 %v349, 7
        %v351 = vsub.s32 %v348, %v350
        %v352 = vrot.slane %v344, %v351
        %v354 = vunpack.c.l.s4 1983009808
        %v355 = vunpack.c.0.s8 %v354
        %v356 = vlaneseq
        %v357 = vshrl.u32 %v356, 7
        %v358 = vsub.s32 %v355, %v357
        %v359 = vrot.slane %v345, %v358
        %v360 = vcombine.low %v352, %v359
        %v361 = vcombine.low %v269, %v276
        %v362 = vcombine.low %v284, %v292
        %v364 = vunpack.c.l.s4 1983009808
        %v365 = vunpack.c.0.s8 %v364
        %v366 = vlaneseq
        %v367 = vshrl.u32 %v366, 7
        %v368 = vsub.s32 %v365, %v367
        %v369 = vrot.slane %v361, %v368
        %v371 = vunpack.c.l.s4 1983009808
        %v372 = vunpack.c.0.s8 %v371
        %v373 = vlaneseq
        %v374 = vshrl.u32 %v373, 7
        %v375 = vsub.s32 %v372, %v374
        %v376 = vrot.slane %v362, %v375
        %v377 = vcombine.low %v369, %v376
        %v378 = vcombine.low %v291, %v293
        %v379 = vcombine.low %v300, %v308
        %v381 = vunpack.c.l.s4 1983009808
        %v382 = vunpack.c.0.s8 %v381
        %v383 = vlaneseq
        %v384 = vshrl.u32 %v383, 7
        %v385 = vsub.s32 %v382, %v384
        %v386 = vrot.slane %v378, %v385
        %v388 = vunpack.c.l.s4 1983009808
        %v389 = vunpack.c.0.s8 %v388
        %v390 = vlaneseq
        %v391 = vshrl.u32 %v390, 7
        %v392 = vsub.s32 %v389, %v391
        %v393 = vrot.slane %v379, %v392
        %v394 = vcombine.low %v386, %v393
        %v395 = vcombine.low %v316, %v315
        %v396 = vcombine.low %v317, %v324
        %v398 = vunpack.c.l.s4 1983009808
        %v399 = vunpack.c.0.s8 %v398
        %v400 = vlaneseq
        %v401 = vshrl.u32 %v400, 7
        %v402 = vsub.s32 %v399, %v401
        %v403 = vrot.slane %v395, %v402
        %v405 = vunpack.c.l.s4 1983009808
        %v406 = vunpack.c.0.s8 %v405
        %v407 = vlaneseq
        %v408 = vshrl.u32 %v407, 7
        %v409 = vsub.s32 %v406, %v408
        %v410 = vrot.slane %v396, %v409
        %v411 = vcombine.low %v403, %v410
        %vm412 = vcmask 130048
        %v413 = vsel %vm412, %v343, 0
        %v415 = vsel %vm412, %v360, 0
        %v417 = vsel %vm412, %v377, 0
        %v419 = vsel %vm412, %v394, 0
        %v421 = vsel %vm412, %v411, 0
        %423 = vmatprep.subr.mxu0 0.0
        %424 = vmatpush1.msra.mxu0 %v325
        %425 = vmatprep.subr.mxu0 0.0
        %426 = vmatpush1.msra.mxu0 %v326
        %427 = vmatprep.subr.mxu0 0.0
        %428 = vmatpush1.msra.mxu0 0.0
        %429 = vmatprep.subr.mxu0 0.0
        %430 = vmatpush1.msra.mxu0 0.0
        %431 = vmatprep.subr.mxu0 0.0
        %432 = vmatpush1.msra.mxu0 0.0
        %433 = vmatprep.subr.mxu0 0.0
        %434 = vmatpush1.msra.mxu0 0.0
        %435 = vmatprep.subr.mxu0 0.0
        %436 = vmatpush1.msra.mxu0 0.0
        %437 = vmatprep.subr.mxu0 0.0
        %438 = vmatpush1.msra.mxu0 0.0
        %439 = vmatprep.subr.mxu0 0.0
        %440 = vmatpush1.msra.mxu0 0.0
        %441 = vmatprep.subr.mxu0 0.0
        %442 = vmatpush1.msra.mxu0 0.0
        %443 = vmatprep.subr.mxu0 0.0
        %444 = vmatpush1.msra.mxu0 0.0
        %445 = vmatprep.subr.mxu0 0.0
        %446 = vmatpush1.msra.mxu0 0.0
        %447 = vmatprep.subr.mxu0 0.0
        %448 = vmatpush1.msra.mxu0 0.0
        %449 = vmatprep.subr.mxu0 0.0
        %450 = vmatpush1.msra.mxu0 0.0
        %451 = vmatprep.subr.mxu0 0.0
        %452 = vmatpush1.msra.mxu0 0.0
        %453 = vmatprep.subr.mxu0 0.0
        %454 = vmatpush1.msra.mxu0 0.0
        %455 = vmatprep.subr.mxu0 0.0
        %456 = vmatpush1.msra.mxu0 0.0
        %457 = vmatprep.subr.mxu0 0.0
        %458 = vmatpush1.msra.mxu0 0.0
        %459 = vmatprep.subr.mxu0 0.0
        %460 = vmatpush1.msra.mxu0 0.0
        %461 = vmatprep.subr.mxu0 0.0
        %462 = vmatpush1.msra.mxu0 0.0
        %463 = vmatprep.subr.mxu0 0.0
        %464 = vmatpush1.msra.mxu0 0.0
        %465 = vmatprep.subr.mxu0 0.0
        %466 = vmatpush1.msra.mxu0 0.0
        %467 = vmatprep.subr.mxu0 0.0
        %468 = vmatpush1.msra.mxu0 0.0
        %469 = vmatprep.subr.mxu0 0.0
        %470 = vmatpush1.msra.mxu0 0.0
        %471 = vmatprep.subr.mxu0 0.0
        %472 = vmatpush1.msra.mxu0 0.0
        %473 = vmatprep.subr.mxu0 0.0
        %474 = vmatpush1.msra.mxu0 0.0
        %475 = vmatprep.subr.mxu0 0.0
        %476 = vmatpush1.msra.mxu0 0.0
        %477 = vmatprep.subr.mxu0 0.0
        %478 = vmatpush1.msra.mxu0 0.0
        %479 = vmatprep.subr.mxu0 0.0
        %480 = vmatpush1.msra.mxu0 0.0
        %481 = vmatprep.subr.mxu0 0.0
        %482 = vmatpush1.msra.mxu0 0.0
        %483 = vmatprep.subr.mxu0 0.0
        %484 = vmatpush1.msra.mxu0 0.0
        %485 = vmatprep.subr.mxu0 0.0
        %486 = vmatpush1.msra.mxu0 0.0
        %487 = vmatprep.mubr.f32.mxu0 0.0
        %488 = vmatmul.mubr.f32.gmra.mrb[0].mxu0 %v413
        %v489 = vpop.f32.mrb[0].mxu0
        %v490 = vadd.f32 0.0, %v489
        %v491 = vpop.f32.mrb[0].mxu0
        %492 = vmatprep.mubr.f32.mxu0 0.0
        %493 = vmatmul.mubr.f32.gmra.mrb[0].mxu0 %v415
        %v494 = vpop.f32.mrb[0].mxu0
        %v495 = vadd.f32 0.0, %v494
        %v496 = vpop.f32.mrb[0].mxu0
        %497 = vmatprep.mubr.f32.mxu0 0.0
        %498 = vmatmul.mubr.f32.gmra.mrb[0].mxu0 %v417
        %v499 = vpop.f32.mrb[0].mxu0
        %v500 = vadd.f32 0.0, %v499
        %v501 = vpop.f32.mrb[0].mxu0
        %502 = vmatprep.mubr.f32.mxu0 0.0
        %503 = vmatmul.mubr.f32.gmra.mrb[0].mxu0 %v419
        %v504 = vpop.f32.mrb[0].mxu0
        %v505 = vadd.f32 0.0, %v504
        %v506 = vpop.f32.mrb[0].mxu0
        %507 = vmatprep.mubr.f32.mxu0 0.0
        %508 = vmatmul.mubr.f32.gmra.mrb[0].mxu0 %v421
        %v509 = vpop.f32.mrb[0].mxu0
        %v510 = vadd.f32 0.0, %v509
        %v511 = vpop.f32.mrb[0].mxu0
        %512 = vdwg.mxu0
        %v518 = vcombine.high %v490, %v490
        %v520 = vunpack.c.l.s4 1983009808
        %v521 = vunpack.c.0.s8 %v520
        %v522 = vlaneseq
        %v523 = vshrl.u32 %v522, 7
        %v524 = vsub.s32 %v521, %v523
        %v525 = vrot.slane %v490, %v524
        %v527 = vunpack.c.l.s4 1983009808
        %v528 = vunpack.c.0.s8 %v527
        %v529 = vlaneseq
        %v530 = vshrl.u32 %v529, 7
        %v531 = vsub.s32 %v528, %v530
        %v532 = vrot.slane %v518, %v531
        %v533 = vcombine.high %v525, %v525
        %v534 = vcombine.high %v532, %v532
        %v535 = vcombine.high %v495, %v495
        %v537 = vunpack.c.l.s4 1983009808
        %v538 = vunpack.c.0.s8 %v537
        %v539 = vlaneseq
        %v540 = vshrl.u32 %v539, 7
        %v541 = vsub.s32 %v538, %v540
        %v542 = vrot.slane %v495, %v541
        %v544 = vunpack.c.l.s4 1983009808
        %v545 = vunpack.c.0.s8 %v544
        %v546 = vlaneseq
        %v547 = vshrl.u32 %v546, 7
        %v548 = vsub.s32 %v545, %v547
        %v549 = vrot.slane %v535, %v548
        %v550 = vcombine.high %v542, %v542
        %v551 = vcombine.high %v549, %v549
        %v552 = vcombine.high %v500, %v500
        %v554 = vunpack.c.l.s4 1983009808
        %v555 = vunpack.c.0.s8 %v554
        %v556 = vlaneseq
        %v557 = vshrl.u32 %v556, 7
        %v558 = vsub.s32 %v555, %v557
        %v559 = vrot.slane %v500, %v558
        %v561 = vunpack.c.l.s4 1983009808
        %v562 = vunpack.c.0.s8 %v561
        %v563 = vlaneseq
        %v564 = vshrl.u32 %v563, 7
        %v565 = vsub.s32 %v562, %v564
        %v566 = vrot.slane %v552, %v565
        %v567 = vcombine.high %v559, %v559
        %v568 = vcombine.high %v566, %v566
        %v569 = vcombine.high %v505, %v505
        %v571 = vunpack.c.l.s4 1983009808
        %v572 = vunpack.c.0.s8 %v571
        %v573 = vlaneseq
        %v574 = vshrl.u32 %v573, 7
        %v575 = vsub.s32 %v572, %v574
        %v576 = vrot.slane %v505, %v575
        %v578 = vunpack.c.l.s4 1983009808
        %v579 = vunpack.c.0.s8 %v578
        %v580 = vlaneseq
        %v581 = vshrl.u32 %v580, 7
        %v582 = vsub.s32 %v579, %v581
        %v583 = vrot.slane %v569, %v582
        %v584 = vcombine.high %v576, %v576
        %v585 = vcombine.high %v583, %v583
        %v586 = vcombine.high %v510, %v510
        %v588 = vunpack.c.l.s4 1983009808
        %v589 = vunpack.c.0.s8 %v588
        %v590 = vlaneseq
        %v591 = vshrl.u32 %v590, 7
        %v592 = vsub.s32 %v589, %v591
        %v593 = vrot.slane %v510, %v592
        %v595 = vunpack.c.l.s4 1983009808
        %v596 = vunpack.c.0.s8 %v595
        %v597 = vlaneseq
        %v598 = vshrl.u32 %v597, 7
        %v599 = vsub.s32 %v596, %v598
        %v600 = vrot.slane %v586, %v599
        %v601 = vcombine.high %v593, %v593
        %v602 = vcombine.high %v600, %v600
        %619 = vrot.lane.b32.xlu0 %v525, 96
        %v620 = vpop.permute.xlu0 %619
        %621 = vrot.lane.b32.xlu0 %v533, 96
        %v622 = vpop.permute.xlu0 %621
        %623 = vrot.lane.b32.xlu0 %v532, 96
        %v624 = vpop.permute.xlu0 %623
        %625 = vrot.lane.b32.xlu0 %v534, 96
        %v626 = vpop.permute.xlu0 %625
        %627 = vrot.lane.b32.xlu0 %v550, 96
        %v628 = vpop.permute.xlu0 %627
        %629 = vrot.lane.b32.xlu0 %v549, 96
        %v630 = vpop.permute.xlu0 %629
        %631 = vrot.lane.b32.xlu0 %v551, 96
        %v632 = vpop.permute.xlu0 %631
        %633 = vrot.lane.b32.xlu0 %v559, 96
        %v634 = vpop.permute.xlu0 %633
        %635 = vrot.lane.b32.xlu0 %v566, 96
        %v636 = vpop.permute.xlu0 %635
        %637 = vrot.lane.b32.xlu0 %v568, 96
        %v638 = vpop.permute.xlu0 %637
        %639 = vrot.lane.b32.xlu0 %v576, 96
        %v640 = vpop.permute.xlu0 %639
        %641 = vrot.lane.b32.xlu0 %v584, 96
        %v642 = vpop.permute.xlu0 %641
        %643 = vrot.lane.b32.xlu0 %v585, 96
        %v644 = vpop.permute.xlu0 %643
        %645 = vrot.lane.b32.xlu0 %v593, 96
        %v646 = vpop.permute.xlu0 %645
        %647 = vrot.lane.b32.xlu0 %v601, 96
        %v648 = vpop.permute.xlu0 %647
        %649 = vrot.lane.b32.xlu0 %v600, 96
        %v650 = vpop.permute.xlu0 %649
        %667 = vrot.lane.b32.xlu0 %v525, 64
        %v668 = vpop.permute.xlu0 %667
        %669 = vrot.lane.b32.xlu0 %v533, 64
        %v670 = vpop.permute.xlu0 %669
        %671 = vrot.lane.b32.xlu0 %v532, 64
        %v672 = vpop.permute.xlu0 %671
        %673 = vrot.lane.b32.xlu0 %v534, 64
        %v674 = vpop.permute.xlu0 %673
        %675 = vrot.lane.b32.xlu0 %v550, 64
        %v676 = vpop.permute.xlu0 %675
        %677 = vrot.lane.b32.xlu0 %v549, 64
        %v678 = vpop.permute.xlu0 %677
        %679 = vrot.lane.b32.xlu0 %v551, 64
        %v680 = vpop.permute.xlu0 %679
        %681 = vrot.lane.b32.xlu0 %v559, 64
        %v682 = vpop.permute.xlu0 %681
        %683 = vrot.lane.b32.xlu0 %v566, 64
        %v684 = vpop.permute.xlu0 %683
        %685 = vrot.lane.b32.xlu0 %v568, 64
        %v686 = vpop.permute.xlu0 %685
        %687 = vrot.lane.b32.xlu0 %v576, 64
        %v688 = vpop.permute.xlu0 %687
        %689 = vrot.lane.b32.xlu0 %v584, 64
        %v690 = vpop.permute.xlu0 %689
        %691 = vrot.lane.b32.xlu0 %v585, 64
        %v692 = vpop.permute.xlu0 %691
        %693 = vrot.lane.b32.xlu0 %v593, 64
        %v694 = vpop.permute.xlu0 %693
        %695 = vrot.lane.b32.xlu0 %v601, 64
        %v696 = vpop.permute.xlu0 %695
        %697 = vrot.lane.b32.xlu0 %v600, 64
        %v698 = vpop.permute.xlu0 %697
        %vm715 = vcmask 1040384
        %vm716 = vcmask 1042434
        %vm717 = vmor %vm715, %vm716
        %vm718 = vcmask 1044484
        %vm719 = vmor %vm717, %vm718
        %vm720 = vcmask 1046534
        %vm721 = vmor %vm719, %vm720
        %v722 = vrot.slane %v525, 7
        %v723 = vrot.slane %v722, 2
        %v724 = vrot.slane %v533, 7
        %v725 = vsel %vm721, %v723, %v724
        %v726 = vrot.slane %v724, 2
        %v727 = vrot.slane %v532, 7
        %v728 = vsel %vm721, %v726, %v727
        %v729 = vrot.slane %v727, 2
        %v730 = vrot.slane %v534, 7
        %v731 = vsel %vm721, %v729, %v730
        %v732 = vrot.slane %v730, 2
        %v733 = vrot.slane %v542, 7
        %v734 = vsel %vm721, %v732, %v733
        %v735 = vrot.slane %v550, 7
        %v736 = vrot.slane %v735, 2
        %v737 = vrot.slane %v549, 7
        %v738 = vsel %vm721, %v736, %v737
        %v739 = vrot.slane %v737, 2
        %v740 = vrot.slane %v551, 7
        %v741 = vsel %vm721, %v739, %v740
        %v742 = vrot.slane %v740, 2
        %v743 = vrot.slane %v559, 7
        %v744 = vsel %vm721, %v742, %v743
        %v745 = vrot.slane %v743, 2
        %v746 = vrot.slane %v567, 7
        %v747 = vsel %vm721, %v745, %v746
        %v748 = vrot.slane %v566, 7
        %v749 = vrot.slane %v748, 2
        %v750 = vrot.slane %v568, 7
        %v751 = vsel %vm721, %v749, %v750
        %v752 = vrot.slane %v750, 2
        %v753 = vrot.slane %v576, 7
        %v754 = vsel %vm721, %v752, %v753
        %v755 = vrot.slane %v753, 2
        %v756 = vrot.slane %v584, 7
        %v757 = vsel %vm721, %v755, %v756
        %v758 = vrot.slane %v756, 2
        %v759 = vrot.slane %v583, 7
        %v760 = vsel %vm721, %v758, %v759
        %v761 = vrot.slane %v585, 7
        %v762 = vrot.slane %v761, 2
        %v763 = vrot.slane %v593, 7
        %v764 = vsel %vm721, %v762, %v763
        %v765 = vrot.slane %v763, 2
        %v766 = vrot.slane %v601, 7
        %v767 = vsel %vm721, %v765, %v766
        %v768 = vrot.slane %v766, 2
        %v769 = vrot.slane %v600, 7
        %v770 = vsel %vm721, %v768, %v769
        %v771 = vrot.slane %v769, 2
        %v772 = vrot.slane %v602, 7
        %v773 = vsel %vm721, %v771, %v772
        %790 = vrot.lane.b32.xlu0 %v725, 96
        %v791 = vpop.permute.xlu0 %790
        %792 = vrot.lane.b32.xlu0 %v728, 96
        %v793 = vpop.permute.xlu0 %792
        %794 = vrot.lane.b32.xlu0 %v731, 96
        %v795 = vpop.permute.xlu0 %794
        %796 = vrot.lane.b32.xlu0 %v734, 96
        %v797 = vpop.permute.xlu0 %796
        %798 = vrot.lane.b32.xlu0 %v738, 96
        %v799 = vpop.permute.xlu0 %798
        %800 = vrot.lane.b32.xlu0 %v741, 96
        %v801 = vpop.permute.xlu0 %800
        %802 = vrot.lane.b32.xlu0 %v744, 96
        %v803 = vpop.permute.xlu0 %802
        %804 = vrot.lane.b32.xlu0 %v747, 96
        %v805 = vpop.permute.xlu0 %804
        %806 = vrot.lane.b32.xlu0 %v751, 96
        %v807 = vpop.permute.xlu0 %806
        %808 = vrot.lane.b32.xlu0 %v754, 96
        %v809 = vpop.permute.xlu0 %808
        %810 = vrot.lane.b32.xlu0 %v757, 96
        %v811 = vpop.permute.xlu0 %810
        %812 = vrot.lane.b32.xlu0 %v760, 96
        %v813 = vpop.permute.xlu0 %812
        %814 = vrot.lane.b32.xlu0 %v764, 96
        %v815 = vpop.permute.xlu0 %814
        %816 = vrot.lane.b32.xlu0 %v767, 96
        %v817 = vpop.permute.xlu0 %816
        %818 = vrot.lane.b32.xlu0 %v770, 96
        %v819 = vpop.permute.xlu0 %818
        %820 = vrot.lane.b32.xlu0 %v773, 96
        %v821 = vpop.permute.xlu0 %820
        %838 = vrot.lane.b32.xlu0 %v725, 64
        %v839 = vpop.permute.xlu0 %838
        %840 = vrot.lane.b32.xlu0 %v728, 64
        %v841 = vpop.permute.xlu0 %840
        %842 = vrot.lane.b32.xlu0 %v731, 64
        %v843 = vpop.permute.xlu0 %842
        %844 = vrot.lane.b32.xlu0 %v734, 64
        %v845 = vpop.permute.xlu0 %844
        %846 = vrot.lane.b32.xlu0 %v738, 64
        %v847 = vpop.permute.xlu0 %846
        %848 = vrot.lane.b32.xlu0 %v741, 64
        %v849 = vpop.permute.xlu0 %848
        %850 = vrot.lane.b32.xlu0 %v744, 64
        %v851 = vpop.permute.xlu0 %850
        %852 = vrot.lane.b32.xlu0 %v747, 64
        %v853 = vpop.permute.xlu0 %852
        %854 = vrot.lane.b32.xlu0 %v751, 64
        %v855 = vpop.permute.xlu0 %854
        %856 = vrot.lane.b32.xlu0 %v754, 64
        %v857 = vpop.permute.xlu0 %856
        %858 = vrot.lane.b32.xlu0 %v757, 64
        %v859 = vpop.permute.xlu0 %858
        %860 = vrot.lane.b32.xlu0 %v760, 64
        %v861 = vpop.permute.xlu0 %860
        %862 = vrot.lane.b32.xlu0 %v764, 64
        %v863 = vpop.permute.xlu0 %862
        %864 = vrot.lane.b32.xlu0 %v767, 64
        %v865 = vpop.permute.xlu0 %864
        %866 = vrot.lane.b32.xlu0 %v770, 64
        %v867 = vpop.permute.xlu0 %866
        %868 = vrot.lane.b32.xlu0 %v773, 64
        %v869 = vpop.permute.xlu0 %868
        %v886 = vcombine.low %v525, %v550
        %v888 = vunpack.c.l.s4 1934713408
        %v889 = vunpack.c.0.s8 %v888
        %v890 = vlaneseq
        %v891 = vshrl.u32 %v890, 7
        %v892 = vsub.s32 %v889, %v891
        %v893 = vrot.slane %v886, %v892
        %v894 = vcombine.high %v893, 0.0
        %v895 = vcombine.low %v566, %v585
        %v897 = vunpack.c.l.s4 1934713408
        %v898 = vunpack.c.0.s8 %v897
        %v899 = vlaneseq
        %v900 = vshrl.u32 %v899, 7
        %v901 = vsub.s32 %v898, %v900
        %v902 = vrot.slane %v895, %v901
        %v903 = vcombine.high %v902, 0.0
        %v904 = vcombine.low %v620, %v628
        %v906 = vunpack.c.l.s4 1934713408
        %v907 = vunpack.c.0.s8 %v906
        %v908 = vlaneseq
        %v909 = vshrl.u32 %v908, 7
        %v910 = vsub.s32 %v907, %v909
        %v911 = vrot.slane %v904, %v910
        %v912 = vcombine.high %v911, 0.0
        %v913 = vcombine.low %v636, %v644
        %v915 = vunpack.c.l.s4 1934713408
        %v916 = vunpack.c.0.s8 %v915
        %v917 = vlaneseq
        %v918 = vshrl.u32 %v917, 7
        %v919 = vsub.s32 %v916, %v918
        %v920 = vrot.slane %v913, %v919
        %v921 = vcombine.high %v920, 0.0
        %v922 = vcombine.low %v668, %v676
        %v924 = vunpack.c.l.s4 1934713408
        %v925 = vunpack.c.0.s8 %v924
        %v926 = vlaneseq
        %v927 = vshrl.u32 %v926, 7
        %v928 = vsub.s32 %v925, %v927
        %v929 = vrot.slane %v922, %v928
        %v930 = vcombine.high %v929, 0.0
        %v931 = vcombine.low %v684, %v692
        %v933 = vunpack.c.l.s4 1934713408
        %v934 = vunpack.c.0.s8 %v933
        %v935 = vlaneseq
        %v936 = vshrl.u32 %v935, 7
        %v937 = vsub.s32 %v934, %v936
        %v938 = vrot.slane %v931, %v937
        %v939 = vcombine.high %v938, 0.0
        %v940 = vcombine.low %v725, %v738
        %v942 = vunpack.c.l.s4 1934713408
        %v943 = vunpack.c.0.s8 %v942
        %v944 = vlaneseq
        %v945 = vshrl.u32 %v944, 7
        %v946 = vsub.s32 %v943, %v945
        %v947 = vrot.slane %v940, %v946
        %v948 = vcombine.high %v947, 0.0
        %v949 = vcombine.low %v751, %v764
        %v951 = vunpack.c.l.s4 1934713408
        %v952 = vunpack.c.0.s8 %v951
        %v953 = vlaneseq
        %v954 = vshrl.u32 %v953, 7
        %v955 = vsub.s32 %v952, %v954
        %v956 = vrot.slane %v949, %v955
        %v957 = vcombine.high %v956, 0.0
        %v958 = vcombine.low %v791, %v799
        %v960 = vunpack.c.l.s4 1934713408
        %v961 = vunpack.c.0.s8 %v960
        %v962 = vlaneseq
        %v963 = vshrl.u32 %v962, 7
        %v964 = vsub.s32 %v961, %v963
        %v965 = vrot.slane %v958, %v964
        %v966 = vcombine.high %v965, 0.0
        %v967 = vcombine.low %v807, %v815
        %v969 = vunpack.c.l.s4 1934713408
        %v970 = vunpack.c.0.s8 %v969
        %v971 = vlaneseq
        %v972 = vshrl.u32 %v971, 7
        %v973 = vsub.s32 %v970, %v972
        %v974 = vrot.slane %v967, %v973
        %v975 = vcombine.high %v974, 0.0
        %v976 = vcombine.low %v839, %v847
        %v978 = vunpack.c.l.s4 1934713408
        %v979 = vunpack.c.0.s8 %v978
        %v980 = vlaneseq
        %v981 = vshrl.u32 %v980, 7
        %v982 = vsub.s32 %v979, %v981
        %v983 = vrot.slane %v976, %v982
        %v984 = vcombine.high %v983, 0.0
        %v985 = vcombine.low %v855, %v863
        %v987 = vunpack.c.l.s4 1934713408
        %v988 = vunpack.c.0.s8 %v987
        %v989 = vlaneseq
        %v990 = vshrl.u32 %v989, 7
        %v991 = vsub.s32 %v988, %v990
        %v992 = vrot.slane %v985, %v991
        %v993 = vcombine.high %v992, 0.0
        %v994 = vcombine.low %v533, %v549
        %v996 = vunpack.c.l.s4 1934713408
        %v997 = vunpack.c.0.s8 %v996
        %v998 = vlaneseq
        %v999 = vshrl.u32 %v998, 7
        %v1000 = vsub.s32 %v997, %v999
        %v1001 = vrot.slane %v994, %v1000
        %v1002 = vcombine.high %v1001, 0.0
        %v1003 = vcombine.low %v568, %v593
        %v1005 = vunpack.c.l.s4 1934713408
        %v1006 = vunpack.c.0.s8 %v1005
        %v1007 = vlaneseq
        %v1008 = vshrl.u32 %v1007, 7
        %v1009 = vsub.s32 %v1006, %v1008
        %v1010 = vrot.slane %v1003, %v1009
        %v1011 = vcombine.high %v1010, 0.0
        %v1012 = vcombine.low %v622, %v630
        %v1014 = vunpack.c.l.s4 1934713408
        %v1015 = vunpack.c.0.s8 %v1014
        %v1016 = vlaneseq
        %v1017 = vshrl.u32 %v1016, 7
        %v1018 = vsub.s32 %v1015, %v1017
        %v1019 = vrot.slane %v1012, %v1018
        %v1020 = vcombine.high %v1019, 0.0
        %v1021 = vcombine.low %v638, %v646
        %v1023 = vunpack.c.l.s4 1934713408
        %v1024 = vunpack.c.0.s8 %v1023
        %v1025 = vlaneseq
        %v1026 = vshrl.u32 %v1025, 7
        %v1027 = vsub.s32 %v1024, %v1026
        %v1028 = vrot.slane %v1021, %v1027
        %v1029 = vcombine.high %v1028, 0.0
        %v1030 = vcombine.low %v670, %v678
        %v1032 = vunpack.c.l.s4 1934713408
        %v1033 = vunpack.c.0.s8 %v1032
        %v1034 = vlaneseq
        %v1035 = vshrl.u32 %v1034, 7
        %v1036 = vsub.s32 %v1033, %v1035
        %v1037 = vrot.slane %v1030, %v1036
        %v1038 = vcombine.high %v1037, 0.0
        %v1039 = vcombine.low %v686, %v694
        %v1041 = vunpack.c.l.s4 1934713408
        %v1042 = vunpack.c.0.s8 %v1041
        %v1043 = vlaneseq
        %v1044 = vshrl.u32 %v1043, 7
        %v1045 = vsub.s32 %v1042, %v1044
        %v1046 = vrot.slane %v1039, %v1045
        %v1047 = vcombine.high %v1046, 0.0
        %v1048 = vcombine.low %v728, %v741
        %v1050 = vunpack.c.l.s4 1934713408
        %v1051 = vunpack.c.0.s8 %v1050
        %v1052 = vlaneseq
        %v1053 = vshrl.u32 %v1052, 7
        %v1054 = vsub.s32 %v1051, %v1053
        %v1055 = vrot.slane %v1048, %v1054
        %v1056 = vcombine.high %v1055, 0.0
        %v1057 = vcombine.low %v754, %v767
        %v1059 = vunpack.c.l.s4 1934713408
        %v1060 = vunpack.c.0.s8 %v1059
        %v1061 = vlaneseq
        %v1062 = vshrl.u32 %v1061, 7
        %v1063 = vsub.s32 %v1060, %v1062
        %v1064 = vrot.slane %v1057, %v1063
        %v1065 = vcombine.high %v1064, 0.0
        %v1066 = vcombine.low %v793, %v801
        %v1068 = vunpack.c.l.s4 1934713408
        %v1069 = vunpack.c.0.s8 %v1068
        %v1070 = vlaneseq
        %v1071 = vshrl.u32 %v1070, 7
        %v1072 = vsub.s32 %v1069, %v1071
        %v1073 = vrot.slane %v1066, %v1072
        %v1074 = vcombine.high %v1073, 0.0
        %v1075 = vcombine.low %v809, %v817
        %v1077 = vunpack.c.l.s4 1934713408
        %v1078 = vunpack.c.0.s8 %v1077
        %v1079 = vlaneseq
        %v1080 = vshrl.u32 %v1079, 7
        %v1081 = vsub.s32 %v1078, %v1080
        %v1082 = vrot.slane %v1075, %v1081
        %v1083 = vcombine.high %v1082, 0.0
        %v1084 = vcombine.low %v841, %v849
        %v1086 = vunpack.c.l.s4 1934713408
        %v1087 = vunpack.c.0.s8 %v1086
        %v1088 = vlaneseq
        %v1089 = vshrl.u32 %v1088, 7
        %v1090 = vsub.s32 %v1087, %v1089
        %v1091 = vrot.slane %v1084, %v1090
        %v1092 = vcombine.high %v1091, 0.0
        %v1093 = vcombine.low %v857, %v865
        %v1095 = vunpack.c.l.s4 1934713408
        %v1096 = vunpack.c.0.s8 %v1095
        %v1097 = vlaneseq
        %v1098 = vshrl.u32 %v1097, 7
        %v1099 = vsub.s32 %v1096, %v1098
        %v1100 = vrot.slane %v1093, %v1099
        %v1101 = vcombine.high %v1100, 0.0
        %v1102 = vcombine.low %v532, %v551
        %v1104 = vunpack.c.l.s4 1934713408
        %v1105 = vunpack.c.0.s8 %v1104
        %v1106 = vlaneseq
        %v1107 = vshrl.u32 %v1106, 7
        %v1108 = vsub.s32 %v1105, %v1107
        %v1109 = vrot.slane %v1102, %v1108
        %v1110 = vcombine.high %v1109, 0.0
        %v1111 = vcombine.low %v576, %v601
        %v1113 = vunpack.c.l.s4 1934713408
        %v1114 = vunpack.c.0.s8 %v1113
        %v1115 = vlaneseq
        %v1116 = vshrl.u32 %v1115, 7
        %v1117 = vsub.s32 %v1114, %v1116
        %v1118 = vrot.slane %v1111, %v1117
        %v1119 = vcombine.high %v1118, 0.0
        %v1120 = vcombine.low %v624, %v632
        %v1122 = vunpack.c.l.s4 1934713408
        %v1123 = vunpack.c.0.s8 %v1122
        %v1124 = vlaneseq
        %v1125 = vshrl.u32 %v1124, 7
        %v1126 = vsub.s32 %v1123, %v1125
        %v1127 = vrot.slane %v1120, %v1126
        %v1128 = vcombine.high %v1127, 0.0
        %v1129 = vcombine.low %v640, %v648
        %v1131 = vunpack.c.l.s4 1934713408
        %v1132 = vunpack.c.0.s8 %v1131
        %v1133 = vlaneseq
        %v1134 = vshrl.u32 %v1133, 7
        %v1135 = vsub.s32 %v1132, %v1134
        %v1136 = vrot.slane %v1129, %v1135
        %v1137 = vcombine.high %v1136, 0.0
        %v1138 = vcombine.low %v672, %v680
        %v1140 = vunpack.c.l.s4 1934713408
        %v1141 = vunpack.c.0.s8 %v1140
        %v1142 = vlaneseq
        %v1143 = vshrl.u32 %v1142, 7
        %v1144 = vsub.s32 %v1141, %v1143
        %v1145 = vrot.slane %v1138, %v1144
        %v1146 = vcombine.high %v1145, 0.0
        %v1147 = vcombine.low %v688, %v696
        %v1149 = vunpack.c.l.s4 1934713408
        %v1150 = vunpack.c.0.s8 %v1149
        %v1151 = vlaneseq
        %v1152 = vshrl.u32 %v1151, 7
        %v1153 = vsub.s32 %v1150, %v1152
        %v1154 = vrot.slane %v1147, %v1153
        %v1155 = vcombine.high %v1154, 0.0
        %v1156 = vcombine.low %v731, %v744
        %v1158 = vunpack.c.l.s4 1934713408
        %v1159 = vunpack.c.0.s8 %v1158
        %v1160 = vlaneseq
        %v1161 = vshrl.u32 %v1160, 7
        %v1162 = vsub.s32 %v1159, %v1161
        %v1163 = vrot.slane %v1156, %v1162
        %v1164 = vcombine.high %v1163, 0.0
        %v1165 = vcombine.low %v757, %v770
        %v1167 = vunpack.c.l.s4 1934713408
        %v1168 = vunpack.c.0.s8 %v1167
        %v1169 = vlaneseq
        %v1170 = vshrl.u32 %v1169, 7
        %v1171 = vsub.s32 %v1168, %v1170
        %v1172 = vrot.slane %v1165, %v1171
        %v1173 = vcombine.high %v1172, 0.0
        %v1174 = vcombine.low %v795, %v803
        %v1176 = vunpack.c.l.s4 1934713408
        %v1177 = vunpack.c.0.s8 %v1176
        %v1178 = vlaneseq
        %v1179 = vshrl.u32 %v1178, 7
        %v1180 = vsub.s32 %v1177, %v1179
        %v1181 = vrot.slane %v1174, %v1180
        %v1182 = vcombine.high %v1181, 0.0
        %v1183 = vcombine.low %v811, %v819
        %v1185 = vunpack.c.l.s4 1934713408
        %v1186 = vunpack.c.0.s8 %v1185
        %v1187 = vlaneseq
        %v1188 = vshrl.u32 %v1187, 7
        %v1189 = vsub.s32 %v1186, %v1188
        %v1190 = vrot.slane %v1183, %v1189
        %v1191 = vcombine.high %v1190, 0.0
        %v1192 = vcombine.low %v843, %v851
        %v1194 = vunpack.c.l.s4 1934713408
        %v1195 = vunpack.c.0.s8 %v1194
        %v1196 = vlaneseq
        %v1197 = vshrl.u32 %v1196, 7
        %v1198 = vsub.s32 %v1195, %v1197
        %v1199 = vrot.slane %v1192, %v1198
        %v1200 = vcombine.high %v1199, 0.0
        %v1201 = vcombine.low %v859, %v867
        %v1203 = vunpack.c.l.s4 1934713408
        %v1204 = vunpack.c.0.s8 %v1203
        %v1205 = vlaneseq
        %v1206 = vshrl.u32 %v1205, 7
        %v1207 = vsub.s32 %v1204, %v1206
        %v1208 = vrot.slane %v1201, %v1207
        %v1209 = vcombine.high %v1208, 0.0
        %v1210 = vcombine.low %v534, %v559
        %v1212 = vunpack.c.l.s4 1934713408
        %v1213 = vunpack.c.0.s8 %v1212
        %v1214 = vlaneseq
        %v1215 = vshrl.u32 %v1214, 7
        %v1216 = vsub.s32 %v1213, %v1215
        %v1217 = vrot.slane %v1210, %v1216
        %v1218 = vcombine.high %v1217, 0.0
        %v1219 = vcombine.low %v584, %v600
        %v1221 = vunpack.c.l.s4 1934713408
        %v1222 = vunpack.c.0.s8 %v1221
        %v1223 = vlaneseq
        %v1224 = vshrl.u32 %v1223, 7
        %v1225 = vsub.s32 %v1222, %v1224
        %v1226 = vrot.slane %v1219, %v1225
        %v1227 = vcombine.high %v1226, 0.0
        %v1228 = vcombine.low %v626, %v634
        %v1230 = vunpack.c.l.s4 1934713408
        %v1231 = vunpack.c.0.s8 %v1230
        %v1232 = vlaneseq
        %v1233 = vshrl.u32 %v1232, 7
        %v1234 = vsub.s32 %v1231, %v1233
        %v1235 = vrot.slane %v1228, %v1234
        %v1236 = vcombine.high %v1235, 0.0
        %v1237 = vcombine.low %v642, %v650
        %v1239 = vunpack.c.l.s4 1934713408
        %v1240 = vunpack.c.0.s8 %v1239
        %v1241 = vlaneseq
        %v1242 = vshrl.u32 %v1241, 7
        %v1243 = vsub.s32 %v1240, %v1242
        %v1244 = vrot.slane %v1237, %v1243
        %v1245 = vcombine.high %v1244, 0.0
        %v1246 = vcombine.low %v674, %v682
        %v1248 = vunpack.c.l.s4 1934713408
        %v1249 = vunpack.c.0.s8 %v1248
        %v1250 = vlaneseq
        %v1251 = vshrl.u32 %v1250, 7
        %v1252 = vsub.s32 %v1249, %v1251
        %v1253 = vrot.slane %v1246, %v1252
        %v1254 = vcombine.high %v1253, 0.0
        %v1255 = vcombine.low %v690, %v698
        %v1257 = vunpack.c.l.s4 1934713408
        %v1258 = vunpack.c.0.s8 %v1257
        %v1259 = vlaneseq
        %v1260 = vshrl.u32 %v1259, 7
        %v1261 = vsub.s32 %v1258, %v1260
        %v1262 = vrot.slane %v1255, %v1261
        %v1263 = vcombine.high %v1262, 0.0
        %v1264 = vcombine.low %v734, %v747
        %v1266 = vunpack.c.l.s4 1934713408
        %v1267 = vunpack.c.0.s8 %v1266
        %v1268 = vlaneseq
        %v1269 = vshrl.u32 %v1268, 7
        %v1270 = vsub.s32 %v1267, %v1269
        %v1271 = vrot.slane %v1264, %v1270
        %v1272 = vcombine.high %v1271, 0.0
        %v1273 = vcombine.low %v760, %v773
        %v1275 = vunpack.c.l.s4 1934713408
        %v1276 = vunpack.c.0.s8 %v1275
        %v1277 = vlaneseq
        %v1278 = vshrl.u32 %v1277, 7
        %v1279 = vsub.s32 %v1276, %v1278
        %v1280 = vrot.slane %v1273, %v1279
        %v1281 = vcombine.high %v1280, 0.0
        %v1282 = vcombine.low %v797, %v805
        %v1284 = vunpack.c.l.s4 1934713408
        %v1285 = vunpack.c.0.s8 %v1284
        %v1286 = vlaneseq
        %v1287 = vshrl.u32 %v1286, 7
        %v1288 = vsub.s32 %v1285, %v1287
        %v1289 = vrot.slane %v1282, %v1288
        %v1290 = vcombine.high %v1289, 0.0
        %v1291 = vcombine.low %v813, %v821
        %v1293 = vunpack.c.l.s4 1934713408
        %v1294 = vunpack.c.0.s8 %v1293
        %v1295 = vlaneseq
        %v1296 = vshrl.u32 %v1295, 7
        %v1297 = vsub.s32 %v1294, %v1296
        %v1298 = vrot.slane %v1291, %v1297
        %v1299 = vcombine.high %v1298, 0.0
        %v1300 = vcombine.low %v845, %v853
        %v1302 = vunpack.c.l.s4 1934713408
        %v1303 = vunpack.c.0.s8 %v1302
        %v1304 = vlaneseq
        %v1305 = vshrl.u32 %v1304, 7
        %v1306 = vsub.s32 %v1303, %v1305
        %v1307 = vrot.slane %v1300, %v1306
        %v1308 = vcombine.high %v1307, 0.0
        %v1309 = vcombine.low %v861, %v869
        %v1311 = vunpack.c.l.s4 1934713408
        %v1312 = vunpack.c.0.s8 %v1311
        %v1313 = vlaneseq
        %v1314 = vshrl.u32 %v1313, 7
        %v1315 = vsub.s32 %v1312, %v1314
        %v1316 = vrot.slane %v1309, %v1315
        %v1317 = vcombine.high %v1316, 0.0
        %v1330 = vcombine.low %v893, %v902
        %v1331 = vcombine.low %v911, %v920
        %v1333 = vunpack.c.l.s4 1983009808
        %v1334 = vunpack.c.0.s8 %v1333
        %v1335 = vlaneseq
        %v1336 = vshrl.u32 %v1335, 7
        %v1337 = vsub.s32 %v1334, %v1336
        %v1338 = vrot.slane %v1330, %v1337
        %v1340 = vunpack.c.l.s4 1983009808
        %v1341 = vunpack.c.0.s8 %v1340
        %v1342 = vlaneseq
        %v1343 = vshrl.u32 %v1342, 7
        %v1344 = vsub.s32 %v1341, %v1343
        %v1345 = vrot.slane %v1331, %v1344
        %v1346 = vcombine.low %v1338, %v1345
        %v1347 = vcombine.low %v929, %v938
        %v1348 = vcombine.low %v947, %v956
        %v1350 = vunpack.c.l.s4 1983009808
        %v1351 = vunpack.c.0.s8 %v1350
        %v1352 = vlaneseq
        %v1353 = vshrl.u32 %v1352, 7
        %v1354 = vsub.s32 %v1351, %v1353
        %v1355 = vrot.slane %v1347, %v1354
        %v1357 = vunpack.c.l.s4 1983009808
        %v1358 = vunpack.c.0.s8 %v1357
        %v1359 = vlaneseq
        %v1360 = vshrl.u32 %v1359, 7
        %v1361 = vsub.s32 %v1358, %v1360
        %v1362 = vrot.slane %v1348, %v1361
        %v1363 = vcombine.low %v1355, %v1362
        %v1364 = vcombine.low %v965, %v974
        %v1365 = vcombine.low %v983, %v992
        %v1367 = vunpack.c.l.s4 1983009808
        %v1368 = vunpack.c.0.s8 %v1367
        %v1369 = vlaneseq
        %v1370 = vshrl.u32 %v1369, 7
        %v1371 = vsub.s32 %v1368, %v1370
        %v1372 = vrot.slane %v1364, %v1371
        %v1374 = vunpack.c.l.s4 1983009808
        %v1375 = vunpack.c.0.s8 %v1374
        %v1376 = vlaneseq
        %v1377 = vshrl.u32 %v1376, 7
        %v1378 = vsub.s32 %v1375, %v1377
        %v1379 = vrot.slane %v1365, %v1378
        %v1380 = vcombine.low %v1372, %v1379
        %v1396 = vcombine.low %v894, %v903
        %v1397 = vcombine.low %v912, %v921
        %v1399 = vunpack.c.l.s4 1983009808
        %v1400 = vunpack.c.0.s8 %v1399
        %v1401 = vlaneseq
        %v1402 = vshrl.u32 %v1401, 7
        %v1403 = vsub.s32 %v1400, %v1402
        %v1404 = vrot.slane %v1396, %v1403
        %v1406 = vunpack.c.l.s4 1983009808
        %v1407 = vunpack.c.0.s8 %v1406
        %v1408 = vlaneseq
        %v1409 = vshrl.u32 %v1408, 7
        %v1410 = vsub.s32 %v1407, %v1409
        %v1411 = vrot.slane %v1397, %v1410
        %v1412 = vcombine.low %v1404, %v1411
        %v1413 = vcombine.low %v930, %v939
        %v1414 = vcombine.low %v948, %v957
        %v1416 = vunpack.c.l.s4 1983009808
        %v1417 = vunpack.c.0.s8 %v1416
        %v1418 = vlaneseq
        %v1419 = vshrl.u32 %v1418, 7
        %v1420 = vsub.s32 %v1417, %v1419
        %v1421 = vrot.slane %v1413, %v1420
        %v1423 = vunpack.c.l.s4 1983009808
        %v1424 = vunpack.c.0.s8 %v1423
        %v1425 = vlaneseq
        %v1426 = vshrl.u32 %v1425, 7
        %v1427 = vsub.s32 %v1424, %v1426
        %v1428 = vrot.slane %v1414, %v1427
        %v1429 = vcombine.low %v1421, %v1428
        %v1430 = vcombine.low %v966, %v975
        %v1431 = vcombine.low %v984, %v993
        %v1433 = vunpack.c.l.s4 1983009808
        %v1434 = vunpack.c.0.s8 %v1433
        %v1435 = vlaneseq
        %v1436 = vshrl.u32 %v1435, 7
        %v1437 = vsub.s32 %v1434, %v1436
        %v1438 = vrot.slane %v1430, %v1437
        %v1440 = vunpack.c.l.s4 1983009808
        %v1441 = vunpack.c.0.s8 %v1440
        %v1442 = vlaneseq
        %v1443 = vshrl.u32 %v1442, 7
        %v1444 = vsub.s32 %v1441, %v1443
        %v1445 = vrot.slane %v1431, %v1444
        %v1446 = vcombine.low %v1438, %v1445
        %1447 = vrot.lane.b32.xlu0 %v1412, 32
        %v1448 = vpop.permute.xlu0 %1447
        %1449 = vrot.lane.b32.xlu0 %v1429, 32
        %v1450 = vpop.permute.xlu0 %1449
        %1451 = vrot.lane.b32.xlu0 %v1446, 32
        %v1452 = vpop.permute.xlu0 %1451
        %v1468 = vcombine.low %v1001, %v1010
        %v1469 = vcombine.low %v1019, %v1028
        %v1471 = vunpack.c.l.s4 1983009808
        %v1472 = vunpack.c.0.s8 %v1471
        %v1473 = vlaneseq
        %v1474 = vshrl.u32 %v1473, 7
        %v1475 = vsub.s32 %v1472, %v1474
        %v1476 = vrot.slane %v1468, %v1475
        %v1478 = vunpack.c.l.s4 1983009808
        %v1479 = vunpack.c.0.s8 %v1478
        %v1480 = vlaneseq
        %v1481 = vshrl.u32 %v1480, 7
        %v1482 = vsub.s32 %v1479, %v1481
        %v1483 = vrot.slane %v1469, %v1482
        %v1484 = vcombine.low %v1476, %v1483
        %v1485 = vcombine.low %v1037, %v1046
        %v1486 = vcombine.low %v1055, %v1064
        %v1488 = vunpack.c.l.s4 1983009808
        %v1489 = vunpack.c.0.s8 %v1488
        %v1490 = vlaneseq
        %v1491 = vshrl.u32 %v1490, 7
        %v1492 = vsub.s32 %v1489, %v1491
        %v1493 = vrot.slane %v1485, %v1492
        %v1495 = vunpack.c.l.s4 1983009808
        %v1496 = vunpack.c.0.s8 %v1495
        %v1497 = vlaneseq
        %v1498 = vshrl.u32 %v1497, 7
        %v1499 = vsub.s32 %v1496, %v1498
        %v1500 = vrot.slane %v1486, %v1499
        %v1501 = vcombine.low %v1493, %v1500
        %v1502 = vcombine.low %v1073, %v1082
        %v1503 = vcombine.low %v1091, %v1100
        %v1505 = vunpack.c.l.s4 1983009808
        %v1506 = vunpack.c.0.s8 %v1505
        %v1507 = vlaneseq
        %v1508 = vshrl.u32 %v1507, 7
        %v1509 = vsub.s32 %v1506, %v1508
        %v1510 = vrot.slane %v1502, %v1509
        %v1512 = vunpack.c.l.s4 1983009808
        %v1513 = vunpack.c.0.s8 %v1512
        %v1514 = vlaneseq
        %v1515 = vshrl.u32 %v1514, 7
        %v1516 = vsub.s32 %v1513, %v1515
        %v1517 = vrot.slane %v1503, %v1516
        %v1518 = vcombine.low %v1510, %v1517
        %1519 = vrot.lane.b32.xlu0 %v1484, 64
        %v1520 = vpop.permute.xlu0 %1519
        %1521 = vrot.lane.b32.xlu0 %v1501, 64
        %v1522 = vpop.permute.xlu0 %1521
        %1523 = vrot.lane.b32.xlu0 %v1518, 64
        %v1524 = vpop.permute.xlu0 %1523
        %v1540 = vcombine.low %v1002, %v1011
        %v1541 = vcombine.low %v1020, %v1029
        %v1543 = vunpack.c.l.s4 1983009808
        %v1544 = vunpack.c.0.s8 %v1543
        %v1545 = vlaneseq
        %v1546 = vshrl.u32 %v1545, 7
        %v1547 = vsub.s32 %v1544, %v1546
        %v1548 = vrot.slane %v1540, %v1547
        %v1550 = vunpack.c.l.s4 1983009808
        %v1551 = vunpack.c.0.s8 %v1550
        %v1552 = vlaneseq
        %v1553 = vshrl.u32 %v1552, 7
        %v1554 = vsub.s32 %v1551, %v1553
        %v1555 = vrot.slane %v1541, %v1554
        %v1556 = vcombine.low %v1548, %v1555
        %v1557 = vcombine.low %v1038, %v1047
        %v1558 = vcombine.low %v1056, %v1065
        %v1560 = vunpack.c.l.s4 1983009808
        %v1561 = vunpack.c.0.s8 %v1560
        %v1562 = vlaneseq
        %v1563 = vshrl.u32 %v1562, 7
        %v1564 = vsub.s32 %v1561, %v1563
        %v1565 = vrot.slane %v1557, %v1564
        %v1567 = vunpack.c.l.s4 1983009808
        %v1568 = vunpack.c.0.s8 %v1567
        %v1569 = vlaneseq
        %v1570 = vshrl.u32 %v1569, 7
        %v1571 = vsub.s32 %v1568, %v1570
        %v1572 = vrot.slane %v1558, %v1571
        %v1573 = vcombine.low %v1565, %v1572
        %v1574 = vcombine.low %v1074, %v1083
        %v1575 = vcombine.low %v1092, %v1101
        %v1577 = vunpack.c.l.s4 1983009808
        %v1578 = vunpack.c.0.s8 %v1577
        %v1579 = vlaneseq
        %v1580 = vshrl.u32 %v1579, 7
        %v1581 = vsub.s32 %v1578, %v1580
        %v1582 = vrot.slane %v1574, %v1581
        %v1584 = vunpack.c.l.s4 1983009808
        %v1585 = vunpack.c.0.s8 %v1584
        %v1586 = vlaneseq
        %v1587 = vshrl.u32 %v1586, 7
        %v1588 = vsub.s32 %v1585, %v1587
        %v1589 = vrot.slane %v1575, %v1588
        %v1590 = vcombine.low %v1582, %v1589
        %1591 = vrot.lane.b32.xlu0 %v1556, 96
        %v1592 = vpop.permute.xlu0 %1591
        %1593 = vrot.lane.b32.xlu0 %v1573, 96
        %v1594 = vpop.permute.xlu0 %1593
        %1595 = vrot.lane.b32.xlu0 %v1590, 96
        %v1596 = vpop.permute.xlu0 %1595
        %v1612 = vcombine.low %v1109, %v1118
        %v1613 = vcombine.low %v1127, %v1136
        %v1615 = vunpack.c.l.s4 1983009808
        %v1616 = vunpack.c.0.s8 %v1615
        %v1617 = vlaneseq
        %v1618 = vshrl.u32 %v1617, 7
        %v1619 = vsub.s32 %v1616, %v1618
        %v1620 = vrot.slane %v1612, %v1619
        %v1622 = vunpack.c.l.s4 1983009808
        %v1623 = vunpack.c.0.s8 %v1622
        %v1624 = vlaneseq
        %v1625 = vshrl.u32 %v1624, 7
        %v1626 = vsub.s32 %v1623, %v1625
        %v1627 = vrot.slane %v1613, %v1626
        %v1628 = vcombine.low %v1620, %v1627
        %v1629 = vcombine.low %v1145, %v1154
        %v1630 = vcombine.low %v1163, %v1172
        %v1632 = vunpack.c.l.s4 1983009808
        %v1633 = vunpack.c.0.s8 %v1632
        %v1634 = vlaneseq
        %v1635 = vshrl.u32 %v1634, 7
        %v1636 = vsub.s32 %v1633, %v1635
        %v1637 = vrot.slane %v1629, %v1636
        %v1639 = vunpack.c.l.s4 1983009808
        %v1640 = vunpack.c.0.s8 %v1639
        %v1641 = vlaneseq
        %v1642 = vshrl.u32 %v1641, 7
        %v1643 = vsub.s32 %v1640, %v1642
        %v1644 = vrot.slane %v1630, %v1643
        %v1645 = vcombine.low %v1637, %v1644
        %v1646 = vcombine.low %v1181, %v1190
        %v1647 = vcombine.low %v1199, %v1208
        %v1649 = vunpack.c.l.s4 1983009808
        %v1650 = vunpack.c.0.s8 %v1649
        %v1651 = vlaneseq
        %v1652 = vshrl.u32 %v1651, 7
        %v1653 = vsub.s32 %v1650, %v1652
        %v1654 = vrot.slane %v1646, %v1653
        %v1656 = vunpack.c.l.s4 1983009808
        %v1657 = vunpack.c.0.s8 %v1656
        %v1658 = vlaneseq
        %v1659 = vshrl.u32 %v1658, 7
        %v1660 = vsub.s32 %v1657, %v1659
        %v1661 = vrot.slane %v1647, %v1660
        %v1662 = vcombine.low %v1654, %v1661
        %v1678 = vcombine.low %v1110, %v1119
        %v1679 = vcombine.low %v1128, %v1137
        %v1681 = vunpack.c.l.s4 1983009808
        %v1682 = vunpack.c.0.s8 %v1681
        %v1683 = vlaneseq
        %v1684 = vshrl.u32 %v1683, 7
        %v1685 = vsub.s32 %v1682, %v1684
        %v1686 = vrot.slane %v1678, %v1685
        %v1688 = vunpack.c.l.s4 1983009808
        %v1689 = vunpack.c.0.s8 %v1688
        %v1690 = vlaneseq
        %v1691 = vshrl.u32 %v1690, 7
        %v1692 = vsub.s32 %v1689, %v1691
        %v1693 = vrot.slane %v1679, %v1692
        %v1694 = vcombine.low %v1686, %v1693
        %v1695 = vcombine.low %v1146, %v1155
        %v1696 = vcombine.low %v1164, %v1173
        %v1698 = vunpack.c.l.s4 1983009808
        %v1699 = vunpack.c.0.s8 %v1698
        %v1700 = vlaneseq
        %v1701 = vshrl.u32 %v1700, 7
        %v1702 = vsub.s32 %v1699, %v1701
        %v1703 = vrot.slane %v1695, %v1702
        %v1705 = vunpack.c.l.s4 1983009808
        %v1706 = vunpack.c.0.s8 %v1705
        %v1707 = vlaneseq
        %v1708 = vshrl.u32 %v1707, 7
        %v1709 = vsub.s32 %v1706, %v1708
        %v1710 = vrot.slane %v1696, %v1709
        %v1711 = vcombine.low %v1703, %v1710
        %v1712 = vcombine.low %v1182, %v1191
        %v1713 = vcombine.low %v1200, %v1209
        %v1715 = vunpack.c.l.s4 1983009808
        %v1716 = vunpack.c.0.s8 %v1715
        %v1717 = vlaneseq
        %v1718 = vshrl.u32 %v1717, 7
        %v1719 = vsub.s32 %v1716, %v1718
        %v1720 = vrot.slane %v1712, %v1719
        %v1722 = vunpack.c.l.s4 1983009808
        %v1723 = vunpack.c.0.s8 %v1722
        %v1724 = vlaneseq
        %v1725 = vshrl.u32 %v1724, 7
        %v1726 = vsub.s32 %v1723, %v1725
        %v1727 = vrot.slane %v1713, %v1726
        %v1728 = vcombine.low %v1720, %v1727
        %1729 = vrot.lane.b32.xlu0 %v1694, 32
        %v1730 = vpop.permute.xlu0 %1729
        %1731 = vrot.lane.b32.xlu0 %v1711, 32
        %v1732 = vpop.permute.xlu0 %1731
        %1733 = vrot.lane.b32.xlu0 %v1728, 32
        %v1734 = vpop.permute.xlu0 %1733
        %v1750 = vcombine.low %v1217, %v1226
        %v1751 = vcombine.low %v1235, %v1244
        %v1753 = vunpack.c.l.s4 1983009808
        %v1754 = vunpack.c.0.s8 %v1753
        %v1755 = vlaneseq
        %v1756 = vshrl.u32 %v1755, 7
        %v1757 = vsub.s32 %v1754, %v1756
        %v1758 = vrot.slane %v1750, %v1757
        %v1760 = vunpack.c.l.s4 1983009808
        %v1761 = vunpack.c.0.s8 %v1760
        %v1762 = vlaneseq
        %v1763 = vshrl.u32 %v1762, 7
        %v1764 = vsub.s32 %v1761, %v1763
        %v1765 = vrot.slane %v1751, %v1764
        %v1766 = vcombine.low %v1758, %v1765
        %v1767 = vcombine.low %v1253, %v1262
        %v1768 = vcombine.low %v1271, %v1280
        %v1770 = vunpack.c.l.s4 1983009808
        %v1771 = vunpack.c.0.s8 %v1770
        %v1772 = vlaneseq
        %v1773 = vshrl.u32 %v1772, 7
        %v1774 = vsub.s32 %v1771, %v1773
        %v1775 = vrot.slane %v1767, %v1774
        %v1777 = vunpack.c.l.s4 1983009808
        %v1778 = vunpack.c.0.s8 %v1777
        %v1779 = vlaneseq
        %v1780 = vshrl.u32 %v1779, 7
        %v1781 = vsub.s32 %v1778, %v1780
        %v1782 = vrot.slane %v1768, %v1781
        %v1783 = vcombine.low %v1775, %v1782
        %v1784 = vcombine.low %v1289, %v1298
        %v1785 = vcombine.low %v1307, %v1316
        %v1787 = vunpack.c.l.s4 1983009808
        %v1788 = vunpack.c.0.s8 %v1787
        %v1789 = vlaneseq
        %v1790 = vshrl.u32 %v1789, 7
        %v1791 = vsub.s32 %v1788, %v1790
        %v1792 = vrot.slane %v1784, %v1791
        %v1794 = vunpack.c.l.s4 1983009808
        %v1795 = vunpack.c.0.s8 %v1794
        %v1796 = vlaneseq
        %v1797 = vshrl.u32 %v1796, 7
        %v1798 = vsub.s32 %v1795, %v1797
        %v1799 = vrot.slane %v1785, %v1798
        %v1800 = vcombine.low %v1792, %v1799
        %1801 = vrot.lane.b32.xlu0 %v1766, 64
        %v1802 = vpop.permute.xlu0 %1801
        %1803 = vrot.lane.b32.xlu0 %v1783, 64
        %v1804 = vpop.permute.xlu0 %1803
        %1805 = vrot.lane.b32.xlu0 %v1800, 64
        %v1806 = vpop.permute.xlu0 %1805
        %v1822 = vcombine.low %v1218, %v1227
        %v1823 = vcombine.low %v1236, %v1245
        %v1825 = vunpack.c.l.s4 1983009808
        %v1826 = vunpack.c.0.s8 %v1825
        %v1827 = vlaneseq
        %v1828 = vshrl.u32 %v1827, 7
        %v1829 = vsub.s32 %v1826, %v1828
        %v1830 = vrot.slane %v1822, %v1829
        %v1832 = vunpack.c.l.s4 1983009808
        %v1833 = vunpack.c.0.s8 %v1832
        %v1834 = vlaneseq
        %v1835 = vshrl.u32 %v1834, 7
        %v1836 = vsub.s32 %v1833, %v1835
        %v1837 = vrot.slane %v1823, %v1836
        %v1838 = vcombine.low %v1830, %v1837
        %v1839 = vcombine.low %v1254, %v1263
        %v1840 = vcombine.low %v1272, %v1281
        %v1842 = vunpack.c.l.s4 1983009808
        %v1843 = vunpack.c.0.s8 %v1842
        %v1844 = vlaneseq
        %v1845 = vshrl.u32 %v1844, 7
        %v1846 = vsub.s32 %v1843, %v1845
        %v1847 = vrot.slane %v1839, %v1846
        %v1849 = vunpack.c.l.s4 1983009808
        %v1850 = vunpack.c.0.s8 %v1849
        %v1851 = vlaneseq
        %v1852 = vshrl.u32 %v1851, 7
        %v1853 = vsub.s32 %v1850, %v1852
        %v1854 = vrot.slane %v1840, %v1853
        %v1855 = vcombine.low %v1847, %v1854
        %v1856 = vcombine.low %v1290, %v1299
        %v1857 = vcombine.low %v1308, %v1317
        %v1859 = vunpack.c.l.s4 1983009808
        %v1860 = vunpack.c.0.s8 %v1859
        %v1861 = vlaneseq
        %v1862 = vshrl.u32 %v1861, 7
        %v1863 = vsub.s32 %v1860, %v1862
        %v1864 = vrot.slane %v1856, %v1863
        %v1866 = vunpack.c.l.s4 1983009808
        %v1867 = vunpack.c.0.s8 %v1866
        %v1868 = vlaneseq
        %v1869 = vshrl.u32 %v1868, 7
        %v1870 = vsub.s32 %v1867, %v1869
        %v1871 = vrot.slane %v1857, %v1870
        %v1872 = vcombine.low %v1864, %v1871
        %1873 = vrot.lane.b32.xlu0 %v1838, 96
        %v1874 = vpop.permute.xlu0 %1873
        %1875 = vrot.lane.b32.xlu0 %v1855, 96
        %v1876 = vpop.permute.xlu0 %1875
        %1877 = vrot.lane.b32.xlu0 %v1872, 96
        %v1878 = vpop.permute.xlu0 %1877
        %vm1882 = vcmask 261120
        %v1883 = vsel %vm1882, %v1346, %v1448
        %v1884 = vsel %vm1882, %v1363, %v1450
        %v1885 = vsel %vm1882, %v1380, %v1452
        %vm1886 = vcmask 523264
        %v1887 = vsel %vm1886, %v1883, %v1520
        %v1888 = vsel %vm1886, %v1884, %v1522
        %v1889 = vsel %vm1886, %v1885, %v1524
        %vm1890 = vcmask 785408
        %v1891 = vsel %vm1890, %v1887, %v1592
        %v1892 = vsel %vm1890, %v1888, %v1594
        %v1893 = vsel %vm1890, %v1889, %v1596
        %v1894 = vsel %vm1882, %v1628, %v1730
        %v1895 = vsel %vm1882, %v1645, %v1732
        %v1896 = vsel %vm1882, %v1662, %v1734
        %v1897 = vsel %vm1886, %v1894, %v1802
        %v1898 = vsel %vm1886, %v1895, %v1804
        %v1899 = vsel %vm1886, %v1896, %v1806
        %v1900 = vsel %vm1890, %v1897, %v1874
        %v1901 = vsel %vm1890, %v1898, %v1876
        %v1902 = vsel %vm1890, %v1899, %v1878
        %v1903 = vld [vmem:[%s2] sm:$0xff]
        %vm1904 = vcmask 195584
        %v1906 = vsel %vm1904, %v1903, 0
        %1908 = vmatprep.subr.mxu0 %v1900
        %1909 = vmatpush1.msra.mxu0 %v1891
        %1910 = vmatprep.subr.mxu0 %v1901
        %1911 = vmatpush1.msra.mxu0 %v1892
        %1912 = vmatprep.subr.mxu0 %v1902
        %1913 = vmatpush1.msra.mxu0 %v1893
        %1914 = vmatprep.subr.mxu0 0.0
        %1915 = vmatpush1.msra.mxu0 0.0
        %1916 = vmatprep.subr.mxu0 0.0
        %1917 = vmatpush1.msra.mxu0 0.0
        %1918 = vmatprep.subr.mxu0 0.0
        %1919 = vmatpush1.msra.mxu0 0.0
        %1920 = vmatprep.subr.mxu0 0.0
        %1921 = vmatpush1.msra.mxu0 0.0
        %1922 = vmatprep.subr.mxu0 0.0
        %1923 = vmatpush1.msra.mxu0 0.0
        %1924 = vmatprep.subr.mxu0 0.0
        %1925 = vmatpush1.msra.mxu0 0.0
        %1926 = vmatprep.subr.mxu0 0.0
        %1927 = vmatpush1.msra.mxu0 0.0
        %1928 = vmatprep.subr.mxu0 0.0
        %1929 = vmatpush1.msra.mxu0 0.0
        %1930 = vmatprep.subr.mxu0 0.0
        %1931 = vmatpush1.msra.mxu0 0.0
        %1932 = vmatprep.subr.mxu0 0.0
        %1933 = vmatpush1.msra.mxu0 0.0
        %1934 = vmatprep.subr.mxu0 0.0
        %1935 = vmatpush1.msra.mxu0 0.0
        %1936 = vmatprep.subr.mxu0 0.0
        %1937 = vmatpush1.msra.mxu0 0.0
        %1938 = vmatprep.subr.mxu0 0.0
        %1939 = vmatpush1.msra.mxu0 0.0
        %1940 = vmatprep.subr.mxu0 0.0
        %1941 = vmatpush1.msra.mxu0 0.0
        %1942 = vmatprep.subr.mxu0 0.0
        %1943 = vmatpush1.msra.mxu0 0.0
        %1944 = vmatprep.subr.mxu0 0.0
        %1945 = vmatpush1.msra.mxu0 0.0
        %1946 = vmatprep.subr.mxu0 0.0
        %1947 = vmatpush1.msra.mxu0 0.0
        %1948 = vmatprep.subr.mxu0 0.0
        %1949 = vmatpush1.msra.mxu0 0.0
        %1950 = vmatprep.subr.mxu0 0.0
        %1951 = vmatpush1.msra.mxu0 0.0
        %1952 = vmatprep.subr.mxu0 0.0
        %1953 = vmatpush1.msra.mxu0 0.0
        %1954 = vmatprep.subr.mxu0 0.0
        %1955 = vmatpush1.msra.mxu0 0.0
        %1956 = vmatprep.subr.mxu0 0.0
        %1957 = vmatpush1.msra.mxu0 0.0
        %1958 = vmatprep.subr.mxu0 0.0
        %1959 = vmatpush1.msra.mxu0 0.0
        %1960 = vmatprep.subr.mxu0 0.0
        %1961 = vmatpush1.msra.mxu0 0.0
        %1962 = vmatprep.subr.mxu0 0.0
        %1963 = vmatpush1.msra.mxu0 0.0
        %1964 = vmatprep.subr.mxu0 0.0
        %1965 = vmatpush1.msra.mxu0 0.0
        %1966 = vmatprep.subr.mxu0 0.0
        %1967 = vmatpush1.msra.mxu0 0.0
        %1968 = vmatprep.subr.mxu0 0.0
        %1969 = vmatpush1.msra.mxu0 0.0
        %1970 = vmatprep.subr.mxu0 0.0
        %1971 = vmatpush1.msra.mxu0 0.0
        %1972 = vmatprep.mubr.f32.mxu0 0.0
        %1973 = vmatmul.mubr.f32.gmra.mrb[0].mxu0 %v1906
        %v1974 = vpop.f32.mrb[0].mxu0
        %v1975 = vadd.f32 0.0, %v1974
        %v1976 = vpop.f32.mrb[0].mxu0
        %v1977 = vadd.f32 0.0, %v1976
        %1978 = vdwg.mxu0
        %1979 = vrot.lane.b32.xlu0 %v542, 96
        %v1980 = vpop.permute.xlu0 %1979
        %1981 = vrot.lane.b32.xlu0 %v567, 96
        %v1982 = vpop.permute.xlu0 %1981
        %1983 = vrot.lane.b32.xlu0 %v583, 96
        %v1984 = vpop.permute.xlu0 %1983
        %1985 = vrot.lane.b32.xlu0 %v602, 96
        %v1986 = vpop.permute.xlu0 %1985
        %1987 = vrot.lane.b32.xlu0 %v542, 64
        %v1988 = vpop.permute.xlu0 %1987
        %1989 = vrot.lane.b32.xlu0 %v567, 64
        %v1990 = vpop.permute.xlu0 %1989
        %1991 = vrot.lane.b32.xlu0 %v583, 64
        %v1992 = vpop.permute.xlu0 %1991
        %1993 = vrot.lane.b32.xlu0 %v602, 64
        %v1994 = vpop.permute.xlu0 %1993
        %v1995 = vrot.slane %v733, 2
        %v1996 = vrot.slane %v746, 2
        %v1997 = vrot.slane %v759, 2
        %v1998 = vrot.slane %v772, 2
        %1999 = vrot.lane.b32.xlu0 %v724, 96
        %v2000 = vpop.permute.xlu0 %1999
        %2001 = vrot.lane.b32.xlu0 %v1995, 96
        %v2002 = vpop.permute.xlu0 %2001
        %2003 = vrot.lane.b32.xlu0 %v737, 96
        %v2004 = vpop.permute.xlu0 %2003
        %2005 = vrot.lane.b32.xlu0 %v1996, 96
        %v2006 = vpop.permute.xlu0 %2005
        %2007 = vrot.lane.b32.xlu0 %v750, 96
        %v2008 = vpop.permute.xlu0 %2007
        %2009 = vrot.lane.b32.xlu0 %v1997, 96
        %v2010 = vpop.permute.xlu0 %2009
        %2011 = vrot.lane.b32.xlu0 %v763, 96
        %v2012 = vpop.permute.xlu0 %2011
        %2013 = vrot.lane.b32.xlu0 %v1998, 96
        %v2014 = vpop.permute.xlu0 %2013
        %2015 = vrot.lane.b32.xlu0 %v724, 64
        %v2016 = vpop.permute.xlu0 %2015
        %2017 = vrot.lane.b32.xlu0 %v1995, 64
        %v2018 = vpop.permute.xlu0 %2017
        %2019 = vrot.lane.b32.xlu0 %v737, 64
        %v2020 = vpop.permute.xlu0 %2019
        %2021 = vrot.lane.b32.xlu0 %v1996, 64
        %v2022 = vpop.permute.xlu0 %2021
        %2023 = vrot.lane.b32.xlu0 %v750, 64
        %v2024 = vpop.permute.xlu0 %2023
        %2025 = vrot.lane.b32.xlu0 %v1997, 64
        %v2026 = vpop.permute.xlu0 %2025
        %2027 = vrot.lane.b32.xlu0 %v763, 64
        %v2028 = vpop.permute.xlu0 %2027
        %2029 = vrot.lane.b32.xlu0 %v1998, 64
        %v2030 = vpop.permute.xlu0 %2029
        %v2031 = vrot.slane %v620, 7
        %v2032 = vrot.slane %v2031, 2
        %v2033 = vrot.slane %v622, 7
        %v2034 = vsel %vm721, %v2032, %v2033
        %v2035 = vrot.slane %v2033, 2
        %v2036 = vrot.slane %v624, 7
        %v2037 = vsel %vm721, %v2035, %v2036
        %v2038 = vrot.slane %v2036, 2
        %v2039 = vrot.slane %v626, 7
        %v2040 = vsel %vm721, %v2038, %v2039
        %v2041 = vrot.slane %v2039, 2
        %v2042 = vrot.slane %v1980, 7
        %v2043 = vsel %vm721, %v2041, %v2042
        %v2044 = vrot.slane %v628, 7
        %v2045 = vrot.slane %v2044, 2
        %v2046 = vrot.slane %v630, 7
        %v2047 = vsel %vm721, %v2045, %v2046
        %v2048 = vrot.slane %v2046, 2
        %v2049 = vrot.slane %v632, 7
        %v2050 = vsel %vm721, %v2048, %v2049
        %v2051 = vrot.slane %v2049, 2
        %v2052 = vrot.slane %v634, 7
        %v2053 = vsel %vm721, %v2051, %v2052
        %v2054 = vrot.slane %v2052, 2
        %v2055 = vrot.slane %v1982, 7
        %v2056 = vsel %vm721, %v2054, %v2055
        %v2057 = vrot.slane %v636, 7
        %v2058 = vrot.slane %v2057, 2
        %v2059 = vrot.slane %v638, 7
        %v2060 = vsel %vm721, %v2058, %v2059
        %v2061 = vrot.slane %v2059, 2
        %v2062 = vrot.slane %v640, 7
        %v2063 = vsel %vm721, %v2061, %v2062
        %v2064 = vrot.slane %v2062, 2
        %v2065 = vrot.slane %v642, 7
        %v2066 = vsel %vm721, %v2064, %v2065
        %v2067 = vrot.slane %v2065, 2
        %v2068 = vrot.slane %v1984, 7
        %v2069 = vsel %vm721, %v2067, %v2068
        %v2070 = vrot.slane %v644, 7
        %v2071 = vrot.slane %v2070, 2
        %v2072 = vrot.slane %v646, 7
        %v2073 = vsel %vm721, %v2071, %v2072
        %v2074 = vrot.slane %v2072, 2
        %v2075 = vrot.slane %v648, 7
        %v2076 = vsel %vm721, %v2074, %v2075
        %v2077 = vrot.slane %v2075, 2
        %v2078 = vrot.slane %v650, 7
        %v2079 = vsel %vm721, %v2077, %v2078
        %v2080 = vrot.slane %v2078, 2
        %v2081 = vrot.slane %v1986, 7
        %v2082 = vsel %vm721, %v2080, %v2081
        %v2083 = vrot.slane %v668, 7
        %v2084 = vrot.slane %v2083, 2
        %v2085 = vrot.slane %v670, 7
        %v2086 = vsel %vm721, %v2084, %v2085
        %v2087 = vrot.slane %v2085, 2
        %v2088 = vrot.slane %v672, 7
        %v2089 = vsel %vm721, %v2087, %v2088
        %v2090 = vrot.slane %v2088, 2
        %v2091 = vrot.slane %v674, 7
        %v2092 = vsel %vm721, %v2090, %v2091
        %v2093 = vrot.slane %v2091, 2
        %v2094 = vrot.slane %v1988, 7
        %v2095 = vsel %vm721, %v2093, %v2094
        %v2096 = vrot.slane %v676, 7
        %v2097 = vrot.slane %v2096, 2
        %v2098 = vrot.slane %v678, 7
        %v2099 = vsel %vm721, %v2097, %v2098
        %v2100 = vrot.slane %v2098, 2
        %v2101 = vrot.slane %v680, 7
        %v2102 = vsel %vm721, %v2100, %v2101
        %v2103 = vrot.slane %v2101, 2
        %v2104 = vrot.slane %v682, 7
        %v2105 = vsel %vm721, %v2103, %v2104
        %v2106 = vrot.slane %v2104, 2
        %v2107 = vrot.slane %v1990, 7
        %v2108 = vsel %vm721, %v2106, %v2107
        %v2109 = vrot.slane %v684, 7
        %v2110 = vrot.slane %v2109, 2
        %v2111 = vrot.slane %v686, 7
        %v2112 = vsel %vm721, %v2110, %v2111
        %v2113 = vrot.slane %v2111, 2
        %v2114 = vrot.slane %v688, 7
        %v2115 = vsel %vm721, %v2113, %v2114
        %v2116 = vrot.slane %v2114, 2
        %v2117 = vrot.slane %v690, 7
        %v2118 = vsel %vm721, %v2116, %v2117
        %v2119 = vrot.slane %v2117, 2
        %v2120 = vrot.slane %v1992, 7
        %v2121 = vsel %vm721, %v2119, %v2120
        %v2122 = vrot.slane %v692, 7
        %v2123 = vrot.slane %v2122, 2
        %v2124 = vrot.slane %v694, 7
        %v2125 = vsel %vm721, %v2123, %v2124
        %v2126 = vrot.slane %v2124, 2
        %v2127 = vrot.slane %v696, 7
        %v2128 = vsel %vm721, %v2126, %v2127
        %v2129 = vrot.slane %v2127, 2
        %v2130 = vrot.slane %v698, 7
        %v2131 = vsel %vm721, %v2129, %v2130
        %v2132 = vrot.slane %v2130, 2
        %v2133 = vrot.slane %v1994, 7
        %v2134 = vsel %vm721, %v2132, %v2133
        %v2135 = vrot.slane %v724, 7
        %v2136 = vrot.slane %v2135, 2
        %v2137 = vrot.slane %v728, 7
        %v2138 = vsel %vm721, %v2136, %v2137
        %v2139 = vrot.slane %v2137, 2
        %v2140 = vrot.slane %v731, 7
        %v2141 = vsel %vm721, %v2139, %v2140
        %v2142 = vrot.slane %v2140, 2
        %v2143 = vrot.slane %v734, 7
        %v2144 = vsel %vm721, %v2142, %v2143
        %v2145 = vrot.slane %v2143, 2
        %v2146 = vrot.slane %v1995, 7
        %v2147 = vsel %vm721, %v2145, %v2146
        %v2148 = vrot.slane %v737, 7
        %v2149 = vrot.slane %v2148, 2
        %v2150 = vrot.slane %v741, 7
        %v2151 = vsel %vm721, %v2149, %v2150
        %v2152 = vrot.slane %v2150, 2
        %v2153 = vrot.slane %v744, 7
        %v2154 = vsel %vm721, %v2152, %v2153
        %v2155 = vrot.slane %v2153, 2
        %v2156 = vrot.slane %v747, 7
        %v2157 = vsel %vm721, %v2155, %v2156
        %v2158 = vrot.slane %v2156, 2
        %v2159 = vrot.slane %v1996, 7
        %v2160 = vsel %vm721, %v2158, %v2159
        %v2161 = vrot.slane %v750, 7
        %v2162 = vrot.slane %v2161, 2
        %v2163 = vrot.slane %v754, 7
        %v2164 = vsel %vm721, %v2162, %v2163
        %v2165 = vrot.slane %v2163, 2
        %v2166 = vrot.slane %v757, 7
        %v2167 = vsel %vm721, %v2165, %v2166
        %v2168 = vrot.slane %v2166, 2
        %v2169 = vrot.slane %v760, 7
        %v2170 = vsel %vm721, %v2168, %v2169
        %v2171 = vrot.slane %v2169, 2
        %v2172 = vrot.slane %v1997, 7
        %v2173 = vsel %vm721, %v2171, %v2172
        %v2174 = vrot.slane %v763, 7
        %v2175 = vrot.slane %v2174, 2
        %v2176 = vrot.slane %v767, 7
        %v2177 = vsel %vm721, %v2175, %v2176
        %v2178 = vrot.slane %v2176, 2
        %v2179 = vrot.slane %v770, 7
        %v2180 = vsel %vm721, %v2178, %v2179
        %v2181 = vrot.slane %v2179, 2
        %v2182 = vrot.slane %v773, 7
        %v2183 = vsel %vm721, %v2181, %v2182
        %v2184 = vrot.slane %v2182, 2
        %v2185 = vrot.slane %v1998, 7
        %v2186 = vsel %vm721, %v2184, %v2185
        %v2187 = vrot.slane %v2000, 7
        %v2188 = vrot.slane %v2187, 2
        %v2189 = vrot.slane %v793, 7
        %v2190 = vsel %vm721, %v2188, %v2189
        %v2191 = vrot.slane %v2189, 2
        %v2192 = vrot.slane %v795, 7
        %v2193 = vsel %vm721, %v2191, %v2192
        %v2194 = vrot.slane %v2192, 2
        %v2195 = vrot.slane %v797, 7
        %v2196 = vsel %vm721, %v2194, %v2195
        %v2197 = vrot.slane %v2195, 2
        %v2198 = vrot.slane %v2002, 7
        %v2199 = vsel %vm721, %v2197, %v2198
        %v2200 = vrot.slane %v2004, 7
        %v2201 = vrot.slane %v2200, 2
        %v2202 = vrot.slane %v801, 7
        %v2203 = vsel %vm721, %v2201, %v2202
        %v2204 = vrot.slane %v2202, 2
        %v2205 = vrot.slane %v803, 7
        %v2206 = vsel %vm721, %v2204, %v2205
        %v2207 = vrot.slane %v2205, 2
        %v2208 = vrot.slane %v805, 7
        %v2209 = vsel %vm721, %v2207, %v2208
        %v2210 = vrot.slane %v2208, 2
        %v2211 = vrot.slane %v2006, 7
        %v2212 = vsel %vm721, %v2210, %v2211
        %v2213 = vrot.slane %v2008, 7
        %v2214 = vrot.slane %v2213, 2
        %v2215 = vrot.slane %v809, 7
        %v2216 = vsel %vm721, %v2214, %v2215
        %v2217 = vrot.slane %v2215, 2
        %v2218 = vrot.slane %v811, 7
        %v2219 = vsel %vm721, %v2217, %v2218
        %v2220 = vrot.slane %v2218, 2
        %v2221 = vrot.slane %v813, 7
        %v2222 = vsel %vm721, %v2220, %v2221
        %v2223 = vrot.slane %v2221, 2
        %v2224 = vrot.slane %v2010, 7
        %v2225 = vsel %vm721, %v2223, %v2224
        %v2226 = vrot.slane %v2012, 7
        %v2227 = vrot.slane %v2226, 2
        %v2228 = vrot.slane %v817, 7
        %v2229 = vsel %vm721, %v2227, %v2228
        %v2230 = vrot.slane %v2228, 2
        %v2231 = vrot.slane %v819, 7
        %v2232 = vsel %vm721, %v2230, %v2231
        %v2233 = vrot.slane %v2231, 2
        %v2234 = vrot.slane %v821, 7
        %v2235 = vsel %vm721, %v2233, %v2234
        %v2236 = vrot.slane %v2234, 2
        %v2237 = vrot.slane %v2014, 7
        %v2238 = vsel %vm721, %v2236, %v2237
        %v2239 = vrot.slane %v2016, 7
        %v2240 = vrot.slane %v2239, 2
        %v2241 = vrot.slane %v841, 7
        %v2242 = vsel %vm721, %v2240, %v2241
        %v2243 = vrot.slane %v2241, 2
        %v2244 = vrot.slane %v843, 7
        %v2245 = vsel %vm721, %v2243, %v2244
        %v2246 = vrot.slane %v2244, 2
        %v2247 = vrot.slane %v845, 7
        %v2248 = vsel %vm721, %v2246, %v2247
        %v2249 = vrot.slane %v2247, 2
        %v2250 = vrot.slane %v2018, 7
        %v2251 = vsel %vm721, %v2249, %v2250
        %v2252 = vrot.slane %v2020, 7
        %v2253 = vrot.slane %v2252, 2
        %v2254 = vrot.slane %v849, 7
        %v2255 = vsel %vm721, %v2253, %v2254
        %v2256 = vrot.slane %v2254, 2
        %v2257 = vrot.slane %v851, 7
        %v2258 = vsel %vm721, %v2256, %v2257
        %v2259 = vrot.slane %v2257, 2
        %v2260 = vrot.slane %v853, 7
        %v2261 = vsel %vm721, %v2259, %v2260
        %v2262 = vrot.slane %v2260, 2
        %v2263 = vrot.slane %v2022, 7
        %v2264 = vsel %vm721, %v2262, %v2263
        %v2265 = vrot.slane %v2024, 7
        %v2266 = vrot.slane %v2265, 2
        %v2267 = vrot.slane %v857, 7
        %v2268 = vsel %vm721, %v2266, %v2267
        %v2269 = vrot.slane %v2267, 2
        %v2270 = vrot.slane %v859, 7
        %v2271 = vsel %vm721, %v2269, %v2270
        %v2272 = vrot.slane %v2270, 2
        %v2273 = vrot.slane %v861, 7
        %v2274 = vsel %vm721, %v2272, %v2273
        %v2275 = vrot.slane %v2273, 2
        %v2276 = vrot.slane %v2026, 7
        %v2277 = vsel %vm721, %v2275, %v2276
        %v2278 = vrot.slane %v2028, 7
        %v2279 = vrot.slane %v2278, 2
        %v2280 = vrot.slane %v865, 7
        %v2281 = vsel %vm721, %v2279, %v2280
        %v2282 = vrot.slane %v2280, 2
        %v2283 = vrot.slane %v867, 7
        %v2284 = vsel %vm721, %v2282, %v2283
        %v2285 = vrot.slane %v2283, 2
        %v2286 = vrot.slane %v869, 7
        %v2287 = vsel %vm721, %v2285, %v2286
        %v2288 = vrot.slane %v2286, 2
        %v2289 = vrot.slane %v2030, 7
        %v2290 = vsel %vm721, %v2288, %v2289
        %v2371 = vcombine.low %v2034, %v2047
        %v2373 = vunpack.c.l.s4 1934713408
        %v2374 = vunpack.c.0.s8 %v2373
        %v2375 = vlaneseq
        %v2376 = vshrl.u32 %v2375, 7
        %v2377 = vsub.s32 %v2374, %v2376
        %v2378 = vrot.slane %v2371, %v2377
        %v2379 = vcombine.high %v2378, 0.0
        %v2380 = vcombine.low %v2060, %v2073
        %v2382 = vunpack.c.l.s4 1934713408
        %v2383 = vunpack.c.0.s8 %v2382
        %v2384 = vlaneseq
        %v2385 = vshrl.u32 %v2384, 7
        %v2386 = vsub.s32 %v2383, %v2385
        %v2387 = vrot.slane %v2380, %v2386
        %v2388 = vcombine.high %v2387, 0.0
        %v2389 = vcombine.low %v2086, %v2099
        %v2391 = vunpack.c.l.s4 1934713408
        %v2392 = vunpack.c.0.s8 %v2391
        %v2393 = vlaneseq
        %v2394 = vshrl.u32 %v2393, 7
        %v2395 = vsub.s32 %v2392, %v2394
        %v2396 = vrot.slane %v2389, %v2395
        %v2397 = vcombine.high %v2396, 0.0
        %v2398 = vcombine.low %v2112, %v2125
        %v2400 = vunpack.c.l.s4 1934713408
        %v2401 = vunpack.c.0.s8 %v2400
        %v2402 = vlaneseq
        %v2403 = vshrl.u32 %v2402, 7
        %v2404 = vsub.s32 %v2401, %v2403
        %v2405 = vrot.slane %v2398, %v2404
        %v2406 = vcombine.high %v2405, 0.0
        %v2407 = vcombine.low %v2138, %v2151
        %v2409 = vunpack.c.l.s4 1934713408
        %v2410 = vunpack.c.0.s8 %v2409
        %v2411 = vlaneseq
        %v2412 = vshrl.u32 %v2411, 7
        %v2413 = vsub.s32 %v2410, %v2412
        %v2414 = vrot.slane %v2407, %v2413
        %v2415 = vcombine.high %v2414, 0.0
        %v2416 = vcombine.low %v2164, %v2177
        %v2418 = vunpack.c.l.s4 1934713408
        %v2419 = vunpack.c.0.s8 %v2418
        %v2420 = vlaneseq
        %v2421 = vshrl.u32 %v2420, 7
        %v2422 = vsub.s32 %v2419, %v2421
        %v2423 = vrot.slane %v2416, %v2422
        %v2424 = vcombine.high %v2423, 0.0
        %v2425 = vcombine.low %v2190, %v2203
        %v2427 = vunpack.c.l.s4 1934713408
        %v2428 = vunpack.c.0.s8 %v2427
        %v2429 = vlaneseq
        %v2430 = vshrl.u32 %v2429, 7
        %v2431 = vsub.s32 %v2428, %v2430
        %v2432 = vrot.slane %v2425, %v2431
        %v2433 = vcombine.high %v2432, 0.0
        %v2434 = vcombine.low %v2216, %v2229
        %v2436 = vunpack.c.l.s4 1934713408
        %v2437 = vunpack.c.0.s8 %v2436
        %v2438 = vlaneseq
        %v2439 = vshrl.u32 %v2438, 7
        %v2440 = vsub.s32 %v2437, %v2439
        %v2441 = vrot.slane %v2434, %v2440
        %v2442 = vcombine.high %v2441, 0.0
        %v2443 = vcombine.low %v2242, %v2255
        %v2445 = vunpack.c.l.s4 1934713408
        %v2446 = vunpack.c.0.s8 %v2445
        %v2447 = vlaneseq
        %v2448 = vshrl.u32 %v2447, 7
        %v2449 = vsub.s32 %v2446, %v2448
        %v2450 = vrot.slane %v2443, %v2449
        %v2451 = vcombine.high %v2450, 0.0
        %v2452 = vcombine.low %v2268, %v2281
        %v2454 = vunpack.c.l.s4 1934713408
        %v2455 = vunpack.c.0.s8 %v2454
        %v2456 = vlaneseq
        %v2457 = vshrl.u32 %v2456, 7
        %v2458 = vsub.s32 %v2455, %v2457
        %v2459 = vrot.slane %v2452, %v2458
        %v2460 = vcombine.high %v2459, 0.0
        %v2461 = vcombine.low %v2037, %v2050
        %v2463 = vunpack.c.l.s4 1934713408
        %v2464 = vunpack.c.0.s8 %v2463
        %v2465 = vlaneseq
        %v2466 = vshrl.u32 %v2465, 7
        %v2467 = vsub.s32 %v2464, %v2466
        %v2468 = vrot.slane %v2461, %v2467
        %v2469 = vcombine.high %v2468, 0.0
        %v2470 = vcombine.low %v2063, %v2076
        %v2472 = vunpack.c.l.s4 1934713408
        %v2473 = vunpack.c.0.s8 %v2472
        %v2474 = vlaneseq
        %v2475 = vshrl.u32 %v2474, 7
        %v2476 = vsub.s32 %v2473, %v2475
        %v2477 = vrot.slane %v2470, %v2476
        %v2478 = vcombine.high %v2477, 0.0
        %v2479 = vcombine.low %v2089, %v2102
        %v2481 = vunpack.c.l.s4 1934713408
        %v2482 = vunpack.c.0.s8 %v2481
        %v2483 = vlaneseq
        %v2484 = vshrl.u32 %v2483, 7
        %v2485 = vsub.s32 %v2482, %v2484
        %v2486 = vrot.slane %v2479, %v2485
        %v2487 = vcombine.high %v2486, 0.0
        %v2488 = vcombine.low %v2115, %v2128
        %v2490 = vunpack.c.l.s4 1934713408
        %v2491 = vunpack.c.0.s8 %v2490
        %v2492 = vlaneseq
        %v2493 = vshrl.u32 %v2492, 7
        %v2494 = vsub.s32 %v2491, %v2493
        %v2495 = vrot.slane %v2488, %v2494
        %v2496 = vcombine.high %v2495, 0.0
        %v2497 = vcombine.low %v2141, %v2154
        %v2499 = vunpack.c.l.s4 1934713408
        %v2500 = vunpack.c.0.s8 %v2499
        %v2501 = vlaneseq
        %v2502 = vshrl.u32 %v2501, 7
        %v2503 = vsub.s32 %v2500, %v2502
        %v2504 = vrot.slane %v2497, %v2503
        %v2505 = vcombine.high %v2504, 0.0
        %v2506 = vcombine.low %v2167, %v2180
        %v2508 = vunpack.c.l.s4 1934713408
        %v2509 = vunpack.c.0.s8 %v2508
        %v2510 = vlaneseq
        %v2511 = vshrl.u32 %v2510, 7
        %v2512 = vsub.s32 %v2509, %v2511
        %v2513 = vrot.slane %v2506, %v2512
        %v2514 = vcombine.high %v2513, 0.0
        %v2515 = vcombine.low %v2193, %v2206
        %v2517 = vunpack.c.l.s4 1934713408
        %v2518 = vunpack.c.0.s8 %v2517
        %v2519 = vlaneseq
        %v2520 = vshrl.u32 %v2519, 7
        %v2521 = vsub.s32 %v2518, %v2520
        %v2522 = vrot.slane %v2515, %v2521
        %v2523 = vcombine.high %v2522, 0.0
        %v2524 = vcombine.low %v2219, %v2232
        %v2526 = vunpack.c.l.s4 1934713408
        %v2527 = vunpack.c.0.s8 %v2526
        %v2528 = vlaneseq
        %v2529 = vshrl.u32 %v2528, 7
        %v2530 = vsub.s32 %v2527, %v2529
        %v2531 = vrot.slane %v2524, %v2530
        %v2532 = vcombine.high %v2531, 0.0
        %v2533 = vcombine.low %v2245, %v2258
        %v2535 = vunpack.c.l.s4 1934713408
        %v2536 = vunpack.c.0.s8 %v2535
        %v2537 = vlaneseq
        %v2538 = vshrl.u32 %v2537, 7
        %v2539 = vsub.s32 %v2536, %v2538
        %v2540 = vrot.slane %v2533, %v2539
        %v2541 = vcombine.high %v2540, 0.0
        %v2542 = vcombine.low %v2271, %v2284
        %v2544 = vunpack.c.l.s4 1934713408
        %v2545 = vunpack.c.0.s8 %v2544
        %v2546 = vlaneseq
        %v2547 = vshrl.u32 %v2546, 7
        %v2548 = vsub.s32 %v2545, %v2547
        %v2549 = vrot.slane %v2542, %v2548
        %v2550 = vcombine.high %v2549, 0.0
        %v2551 = vcombine.low %v2040, %v2053
        %v2553 = vunpack.c.l.s4 1934713408
        %v2554 = vunpack.c.0.s8 %v2553
        %v2555 = vlaneseq
        %v2556 = vshrl.u32 %v2555, 7
        %v2557 = vsub.s32 %v2554, %v2556
        %v2558 = vrot.slane %v2551, %v2557
        %v2559 = vcombine.high %v2558, 0.0
        %v2560 = vcombine.low %v2066, %v2079
        %v2562 = vunpack.c.l.s4 1934713408
        %v2563 = vunpack.c.0.s8 %v2562
        %v2564 = vlaneseq
        %v2565 = vshrl.u32 %v2564, 7
        %v2566 = vsub.s32 %v2563, %v2565
        %v2567 = vrot.slane %v2560, %v2566
        %v2568 = vcombine.high %v2567, 0.0
        %v2569 = vcombine.low %v2092, %v2105
        %v2571 = vunpack.c.l.s4 1934713408
        %v2572 = vunpack.c.0.s8 %v2571
        %v2573 = vlaneseq
        %v2574 = vshrl.u32 %v2573, 7
        %v2575 = vsub.s32 %v2572, %v2574
        %v2576 = vrot.slane %v2569, %v2575
        %v2577 = vcombine.high %v2576, 0.0
        %v2578 = vcombine.low %v2118, %v2131
        %v2580 = vunpack.c.l.s4 1934713408
        %v2581 = vunpack.c.0.s8 %v2580
        %v2582 = vlaneseq
        %v2583 = vshrl.u32 %v2582, 7
        %v2584 = vsub.s32 %v2581, %v2583
        %v2585 = vrot.slane %v2578, %v2584
        %v2586 = vcombine.high %v2585, 0.0
        %v2587 = vcombine.low %v2144, %v2157
        %v2589 = vunpack.c.l.s4 1934713408
        %v2590 = vunpack.c.0.s8 %v2589
        %v2591 = vlaneseq
        %v2592 = vshrl.u32 %v2591, 7
        %v2593 = vsub.s32 %v2590, %v2592
        %v2594 = vrot.slane %v2587, %v2593
        %v2595 = vcombine.high %v2594, 0.0
        %v2596 = vcombine.low %v2170, %v2183
        %v2598 = vunpack.c.l.s4 1934713408
        %v2599 = vunpack.c.0.s8 %v2598
        %v2600 = vlaneseq
        %v2601 = vshrl.u32 %v2600, 7
        %v2602 = vsub.s32 %v2599, %v2601
        %v2603 = vrot.slane %v2596, %v2602
        %v2604 = vcombine.high %v2603, 0.0
        %v2605 = vcombine.low %v2196, %v2209
        %v2607 = vunpack.c.l.s4 1934713408
        %v2608 = vunpack.c.0.s8 %v2607
        %v2609 = vlaneseq
        %v2610 = vshrl.u32 %v2609, 7
        %v2611 = vsub.s32 %v2608, %v2610
        %v2612 = vrot.slane %v2605, %v2611
        %v2613 = vcombine.high %v2612, 0.0
        %v2614 = vcombine.low %v2222, %v2235
        %v2616 = vunpack.c.l.s4 1934713408
        %v2617 = vunpack.c.0.s8 %v2616
        %v2618 = vlaneseq
        %v2619 = vshrl.u32 %v2618, 7
        %v2620 = vsub.s32 %v2617, %v2619
        %v2621 = vrot.slane %v2614, %v2620
        %v2622 = vcombine.high %v2621, 0.0
        %v2623 = vcombine.low %v2248, %v2261
        %v2625 = vunpack.c.l.s4 1934713408
        %v2626 = vunpack.c.0.s8 %v2625
        %v2627 = vlaneseq
        %v2628 = vshrl.u32 %v2627, 7
        %v2629 = vsub.s32 %v2626, %v2628
        %v2630 = vrot.slane %v2623, %v2629
        %v2631 = vcombine.high %v2630, 0.0
        %v2632 = vcombine.low %v2274, %v2287
        %v2634 = vunpack.c.l.s4 1934713408
        %v2635 = vunpack.c.0.s8 %v2634
        %v2636 = vlaneseq
        %v2637 = vshrl.u32 %v2636, 7
        %v2638 = vsub.s32 %v2635, %v2637
        %v2639 = vrot.slane %v2632, %v2638
        %v2640 = vcombine.high %v2639, 0.0
        %v2641 = vcombine.low %v2043, %v2056
        %v2643 = vunpack.c.l.s4 1934713408
        %v2644 = vunpack.c.0.s8 %v2643
        %v2645 = vlaneseq
        %v2646 = vshrl.u32 %v2645, 7
        %v2647 = vsub.s32 %v2644, %v2646
        %v2648 = vrot.slane %v2641, %v2647
        %v2649 = vcombine.high %v2648, 0.0
        %v2650 = vcombine.low %v2069, %v2082
        %v2652 = vunpack.c.l.s4 1934713408
        %v2653 = vunpack.c.0.s8 %v2652
        %v2654 = vlaneseq
        %v2655 = vshrl.u32 %v2654, 7
        %v2656 = vsub.s32 %v2653, %v2655
        %v2657 = vrot.slane %v2650, %v2656
        %v2658 = vcombine.high %v2657, 0.0
        %v2659 = vcombine.low %v2095, %v2108
        %v2661 = vunpack.c.l.s4 1934713408
        %v2662 = vunpack.c.0.s8 %v2661
        %v2663 = vlaneseq
        %v2664 = vshrl.u32 %v2663, 7
        %v2665 = vsub.s32 %v2662, %v2664
        %v2666 = vrot.slane %v2659, %v2665
        %v2667 = vcombine.high %v2666, 0.0
        %v2668 = vcombine.low %v2121, %v2134
        %v2670 = vunpack.c.l.s4 1934713408
        %v2671 = vunpack.c.0.s8 %v2670
        %v2672 = vlaneseq
        %v2673 = vshrl.u32 %v2672, 7
        %v2674 = vsub.s32 %v2671, %v2673
        %v2675 = vrot.slane %v2668, %v2674
        %v2676 = vcombine.high %v2675, 0.0
        %v2677 = vcombine.low %v2147, %v2160
        %v2679 = vunpack.c.l.s4 1934713408
        %v2680 = vunpack.c.0.s8 %v2679
        %v2681 = vlaneseq
        %v2682 = vshrl.u32 %v2681, 7
        %v2683 = vsub.s32 %v2680, %v2682
        %v2684 = vrot.slane %v2677, %v2683
        %v2685 = vcombine.high %v2684, 0.0
        %v2686 = vcombine.low %v2173, %v2186
        %v2688 = vunpack.c.l.s4 1934713408
        %v2689 = vunpack.c.0.s8 %v2688
        %v2690 = vlaneseq
        %v2691 = vshrl.u32 %v2690, 7
        %v2692 = vsub.s32 %v2689, %v2691
        %v2693 = vrot.slane %v2686, %v2692
        %v2694 = vcombine.high %v2693, 0.0
        %v2695 = vcombine.low %v2199, %v2212
        %v2697 = vunpack.c.l.s4 1934713408
        %v2698 = vunpack.c.0.s8 %v2697
        %v2699 = vlaneseq
        %v2700 = vshrl.u32 %v2699, 7
        %v2701 = vsub.s32 %v2698, %v2700
        %v2702 = vrot.slane %v2695, %v2701
        %v2703 = vcombine.high %v2702, 0.0
        %v2704 = vcombine.low %v2225, %v2238
        %v2706 = vunpack.c.l.s4 1934713408
        %v2707 = vunpack.c.0.s8 %v2706
        %v2708 = vlaneseq
        %v2709 = vshrl.u32 %v2708, 7
        %v2710 = vsub.s32 %v2707, %v2709
        %v2711 = vrot.slane %v2704, %v2710
        %v2712 = vcombine.high %v2711, 0.0
        %v2713 = vcombine.low %v2251, %v2264
        %v2715 = vunpack.c.l.s4 1934713408
        %v2716 = vunpack.c.0.s8 %v2715
        %v2717 = vlaneseq
        %v2718 = vshrl.u32 %v2717, 7
        %v2719 = vsub.s32 %v2716, %v2718
        %v2720 = vrot.slane %v2713, %v2719
        %v2721 = vcombine.high %v2720, 0.0
        %v2722 = vcombine.low %v2277, %v2290
        %v2724 = vunpack.c.l.s4 1934713408
        %v2725 = vunpack.c.0.s8 %v2724
        %v2726 = vlaneseq
        %v2727 = vshrl.u32 %v2726, 7
        %v2728 = vsub.s32 %v2725, %v2727
        %v2729 = vrot.slane %v2722, %v2728
        %v2730 = vcombine.high %v2729, 0.0
        %v2741 = vcombine.low %v2378, %v2387
        %v2743 = vunpack.c.l.s4 1983009808
        %v2744 = vunpack.c.0.s8 %v2743
        %v2745 = vlaneseq
        %v2746 = vshrl.u32 %v2745, 7
        %v2747 = vsub.s32 %v2744, %v2746
        %v2748 = vrot.slane %v2741, %v2747
        %v2749 = vcombine.low %v1362, %v2748
        %v2750 = vcombine.low %v2396, %v2405
        %v2751 = vcombine.low %v2414, %v2423
        %v2753 = vunpack.c.l.s4 1983009808
        %v2754 = vunpack.c.0.s8 %v2753
        %v2755 = vlaneseq
        %v2756 = vshrl.u32 %v2755, 7
        %v2757 = vsub.s32 %v2754, %v2756
        %v2758 = vrot.slane %v2750, %v2757
        %v2760 = vunpack.c.l.s4 1983009808
        %v2761 = vunpack.c.0.s8 %v2760
        %v2762 = vlaneseq
        %v2763 = vshrl.u32 %v2762, 7
        %v2764 = vsub.s32 %v2761, %v2763
        %v2765 = vrot.slane %v2751, %v2764
        %v2766 = vcombine.low %v2758, %v2765
        %v2767 = vcombine.low %v2432, %v2441
        %v2768 = vcombine.low %v2450, %v2459
        %v2770 = vunpack.c.l.s4 1983009808
        %v2771 = vunpack.c.0.s8 %v2770
        %v2772 = vlaneseq
        %v2773 = vshrl.u32 %v2772, 7
        %v2774 = vsub.s32 %v2771, %v2773
        %v2775 = vrot.slane %v2767, %v2774
        %v2777 = vunpack.c.l.s4 1983009808
        %v2778 = vunpack.c.0.s8 %v2777
        %v2779 = vlaneseq
        %v2780 = vshrl.u32 %v2779, 7
        %v2781 = vsub.s32 %v2778, %v2780
        %v2782 = vrot.slane %v2768, %v2781
        %v2783 = vcombine.low %v2775, %v2782
        %v2797 = vcombine.low %v2379, %v2388
        %v2799 = vunpack.c.l.s4 1983009808
        %v2800 = vunpack.c.0.s8 %v2799
        %v2801 = vlaneseq
        %v2802 = vshrl.u32 %v2801, 7
        %v2803 = vsub.s32 %v2800, %v2802
        %v2804 = vrot.slane %v2797, %v2803
        %v2805 = vcombine.low %v1428, %v2804
        %v2806 = vcombine.low %v2397, %v2406
        %v2807 = vcombine.low %v2415, %v2424
        %v2809 = vunpack.c.l.s4 1983009808
        %v2810 = vunpack.c.0.s8 %v2809
        %v2811 = vlaneseq
        %v2812 = vshrl.u32 %v2811, 7
        %v2813 = vsub.s32 %v2810, %v2812
        %v2814 = vrot.slane %v2806, %v2813
        %v2816 = vunpack.c.l.s4 1983009808
        %v2817 = vunpack.c.0.s8 %v2816
        %v2818 = vlaneseq
        %v2819 = vshrl.u32 %v2818, 7
        %v2820 = vsub.s32 %v2817, %v2819
        %v2821 = vrot.slane %v2807, %v2820
        %v2822 = vcombine.low %v2814, %v2821
        %v2823 = vcombine.low %v2433, %v2442
        %v2824 = vcombine.low %v2451, %v2460
        %v2826 = vunpack.c.l.s4 1983009808
        %v2827 = vunpack.c.0.s8 %v2826
        %v2828 = vlaneseq
        %v2829 = vshrl.u32 %v2828, 7
        %v2830 = vsub.s32 %v2827, %v2829
        %v2831 = vrot.slane %v2823, %v2830
        %v2833 = vunpack.c.l.s4 1983009808
        %v2834 = vunpack.c.0.s8 %v2833
        %v2835 = vlaneseq
        %v2836 = vshrl.u32 %v2835, 7
        %v2837 = vsub.s32 %v2834, %v2836
        %v2838 = vrot.slane %v2824, %v2837
        %v2839 = vcombine.low %v2831, %v2838
        %2840 = vrot.lane.b32.xlu0 %v2805, 32
        %v2841 = vpop.permute.xlu0 %2840
        %2842 = vrot.lane.b32.xlu0 %v2822, 32
        %v2843 = vpop.permute.xlu0 %2842
        %2844 = vrot.lane.b32.xlu0 %v2839, 32
        %v2845 = vpop.permute.xlu0 %2844
        %v2859 = vcombine.low %v2468, %v2477
        %v2861 = vunpack.c.l.s4 1983009808
        %v2862 = vunpack.c.0.s8 %v2861
        %v2863 = vlaneseq
        %v2864 = vshrl.u32 %v2863, 7
        %v2865 = vsub.s32 %v2862, %v2864
        %v2866 = vrot.slane %v2859, %v2865
        %v2867 = vcombine.low %v1500, %v2866
        %v2868 = vcombine.low %v2486, %v2495
        %v2869 = vcombine.low %v2504, %v2513
        %v2871 = vunpack.c.l.s4 1983009808
        %v2872 = vunpack.c.0.s8 %v2871
        %v2873 = vlaneseq
        %v2874 = vshrl.u32 %v2873, 7
        %v2875 = vsub.s32 %v2872, %v2874
        %v2876 = vrot.slane %v2868, %v2875
        %v2878 = vunpack.c.l.s4 1983009808
        %v2879 = vunpack.c.0.s8 %v2878
        %v2880 = vlaneseq
        %v2881 = vshrl.u32 %v2880, 7
        %v2882 = vsub.s32 %v2879, %v2881
        %v2883 = vrot.slane %v2869, %v2882
        %v2884 = vcombine.low %v2876, %v2883
        %v2885 = vcombine.low %v2522, %v2531
        %v2886 = vcombine.low %v2540, %v2549
        %v2888 = vunpack.c.l.s4 1983009808
        %v2889 = vunpack.c.0.s8 %v2888
        %v2890 = vlaneseq
        %v2891 = vshrl.u32 %v2890, 7
        %v2892 = vsub.s32 %v2889, %v2891
        %v2893 = vrot.slane %v2885, %v2892
        %v2895 = vunpack.c.l.s4 1983009808
        %v2896 = vunpack.c.0.s8 %v2895
        %v2897 = vlaneseq
        %v2898 = vshrl.u32 %v2897, 7
        %v2899 = vsub.s32 %v2896, %v2898
        %v2900 = vrot.slane %v2886, %v2899
        %v2901 = vcombine.low %v2893, %v2900
        %2902 = vrot.lane.b32.xlu0 %v2867, 64
        %v2903 = vpop.permute.xlu0 %2902
        %2904 = vrot.lane.b32.xlu0 %v2884, 64
        %v2905 = vpop.permute.xlu0 %2904
        %2906 = vrot.lane.b32.xlu0 %v2901, 64
        %v2907 = vpop.permute.xlu0 %2906
        %v2921 = vcombine.low %v2469, %v2478
        %v2923 = vunpack.c.l.s4 1983009808
        %v2924 = vunpack.c.0.s8 %v2923
        %v2925 = vlaneseq
        %v2926 = vshrl.u32 %v2925, 7
        %v2927 = vsub.s32 %v2924, %v2926
        %v2928 = vrot.slane %v2921, %v2927
        %v2929 = vcombine.low %v1572, %v2928
        %v2930 = vcombine.low %v2487, %v2496
        %v2931 = vcombine.low %v2505, %v2514
        %v2933 = vunpack.c.l.s4 1983009808
        %v2934 = vunpack.c.0.s8 %v2933
        %v2935 = vlaneseq
        %v2936 = vshrl.u32 %v2935, 7
        %v2937 = vsub.s32 %v2934, %v2936
        %v2938 = vrot.slane %v2930, %v2937
        %v2940 = vunpack.c.l.s4 1983009808
        %v2941 = vunpack.c.0.s8 %v2940
        %v2942 = vlaneseq
        %v2943 = vshrl.u32 %v2942, 7
        %v2944 = vsub.s32 %v2941, %v2943
        %v2945 = vrot.slane %v2931, %v2944
        %v2946 = vcombine.low %v2938, %v2945
        %v2947 = vcombine.low %v2523, %v2532
        %v2948 = vcombine.low %v2541, %v2550
        %v2950 = vunpack.c.l.s4 1983009808
        %v2951 = vunpack.c.0.s8 %v2950
        %v2952 = vlaneseq
        %v2953 = vshrl.u32 %v2952, 7
        %v2954 = vsub.s32 %v2951, %v2953
        %v2955 = vrot.slane %v2947, %v2954
        %v2957 = vunpack.c.l.s4 1983009808
        %v2958 = vunpack.c.0.s8 %v2957
        %v2959 = vlaneseq
        %v2960 = vshrl.u32 %v2959, 7
        %v2961 = vsub.s32 %v2958, %v2960
        %v2962 = vrot.slane %v2948, %v2961
        %v2963 = vcombine.low %v2955, %v2962
        %2964 = vrot.lane.b32.xlu0 %v2929, 96
        %v2965 = vpop.permute.xlu0 %2964
        %2966 = vrot.lane.b32.xlu0 %v2946, 96
        %v2967 = vpop.permute.xlu0 %2966
        %2968 = vrot.lane.b32.xlu0 %v2963, 96
        %v2969 = vpop.permute.xlu0 %2968
        %v2983 = vcombine.low %v2558, %v2567
        %v2985 = vunpack.c.l.s4 1983009808
        %v2986 = vunpack.c.0.s8 %v2985
        %v2987 = vlaneseq
        %v2988 = vshrl.u32 %v2987, 7
        %v2989 = vsub.s32 %v2986, %v2988
        %v2990 = vrot.slane %v2983, %v2989
        %v2991 = vcombine.low %v1644, %v2990
        %v2992 = vcombine.low %v2576, %v2585
        %v2993 = vcombine.low %v2594, %v2603
        %v2995 = vunpack.c.l.s4 1983009808
        %v2996 = vunpack.c.0.s8 %v2995
        %v2997 = vlaneseq
        %v2998 = vshrl.u32 %v2997, 7
        %v2999 = vsub.s32 %v2996, %v2998
        %v3000 = vrot.slane %v2992, %v2999
        %v3002 = vunpack.c.l.s4 1983009808
        %v3003 = vunpack.c.0.s8 %v3002
        %v3004 = vlaneseq
        %v3005 = vshrl.u32 %v3004, 7
        %v3006 = vsub.s32 %v3003, %v3005
        %v3007 = vrot.slane %v2993, %v3006
        %v3008 = vcombine.low %v3000, %v3007
        %v3009 = vcombine.low %v2612, %v2621
        %v3010 = vcombine.low %v2630, %v2639
        %v3012 = vunpack.c.l.s4 1983009808
        %v3013 = vunpack.c.0.s8 %v3012
        %v3014 = vlaneseq
        %v3015 = vshrl.u32 %v3014, 7
        %v3016 = vsub.s32 %v3013, %v3015
        %v3017 = vrot.slane %v3009, %v3016
        %v3019 = vunpack.c.l.s4 1983009808
        %v3020 = vunpack.c.0.s8 %v3019
        %v3021 = vlaneseq
        %v3022 = vshrl.u32 %v3021, 7
        %v3023 = vsub.s32 %v3020, %v3022
        %v3024 = vrot.slane %v3010, %v3023
        %v3025 = vcombine.low %v3017, %v3024
        %v3039 = vcombine.low %v2559, %v2568
        %v3041 = vunpack.c.l.s4 1983009808
        %v3042 = vunpack.c.0.s8 %v3041
        %v3043 = vlaneseq
        %v3044 = vshrl.u32 %v3043, 7
        %v3045 = vsub.s32 %v3042, %v3044
        %v3046 = vrot.slane %v3039, %v3045
        %v3047 = vcombine.low %v1710, %v3046
        %v3048 = vcombine.low %v2577, %v2586
        %v3049 = vcombine.low %v2595, %v2604
        %v3051 = vunpack.c.l.s4 1983009808
        %v3052 = vunpack.c.0.s8 %v3051
        %v3053 = vlaneseq
        %v3054 = vshrl.u32 %v3053, 7
        %v3055 = vsub.s32 %v3052, %v3054
        %v3056 = vrot.slane %v3048, %v3055
        %v3058 = vunpack.c.l.s4 1983009808
        %v3059 = vunpack.c.0.s8 %v3058
        %v3060 = vlaneseq
        %v3061 = vshrl.u32 %v3060, 7
        %v3062 = vsub.s32 %v3059, %v3061
        %v3063 = vrot.slane %v3049, %v3062
        %v3064 = vcombine.low %v3056, %v3063
        %v3065 = vcombine.low %v2613, %v2622
        %v3066 = vcombine.low %v2631, %v2640
        %v3068 = vunpack.c.l.s4 1983009808
        %v3069 = vunpack.c.0.s8 %v3068
        %v3070 = vlaneseq
        %v3071 = vshrl.u32 %v3070, 7
        %v3072 = vsub.s32 %v3069, %v3071
        %v3073 = vrot.slane %v3065, %v3072
        %v3075 = vunpack.c.l.s4 1983009808
        %v3076 = vunpack.c.0.s8 %v3075
        %v3077 = vlaneseq
        %v3078 = vshrl.u32 %v3077, 7
        %v3079 = vsub.s32 %v3076, %v3078
        %v3080 = vrot.slane %v3066, %v3079
        %v3081 = vcombine.low %v3073, %v3080
        %3082 = vrot.lane.b32.xlu0 %v3047, 32
        %v3083 = vpop.permute.xlu0 %3082
        %3084 = vrot.lane.b32.xlu0 %v3064, 32
        %v3085 = vpop.permute.xlu0 %3084
        %3086 = vrot.lane.b32.xlu0 %v3081, 32
        %v3087 = vpop.permute.xlu0 %3086
        %v3101 = vcombine.low %v2648, %v2657
        %v3103 = vunpack.c.l.s4 1983009808
        %v3104 = vunpack.c.0.s8 %v3103
        %v3105 = vlaneseq
        %v3106 = vshrl.u32 %v3105, 7
        %v3107 = vsub.s32 %v3104, %v3106
        %v3108 = vrot.slane %v3101, %v3107
        %v3109 = vcombine.low %v1782, %v3108
        %v3110 = vcombine.low %v2666, %v2675
        %v3111 = vcombine.low %v2684, %v2693
        %v3113 = vunpack.c.l.s4 1983009808
        %v3114 = vunpack.c.0.s8 %v3113
        %v3115 = vlaneseq
        %v3116 = vshrl.u32 %v3115, 7
        %v3117 = vsub.s32 %v3114, %v3116
        %v3118 = vrot.slane %v3110, %v3117
        %v3120 = vunpack.c.l.s4 1983009808
        %v3121 = vunpack.c.0.s8 %v3120
        %v3122 = vlaneseq
        %v3123 = vshrl.u32 %v3122, 7
        %v3124 = vsub.s32 %v3121, %v3123
        %v3125 = vrot.slane %v3111, %v3124
        %v3126 = vcombine.low %v3118, %v3125
        %v3127 = vcombine.low %v2702, %v2711
        %v3128 = vcombine.low %v2720, %v2729
        %v3130 = vunpack.c.l.s4 1983009808
        %v3131 = vunpack.c.0.s8 %v3130
        %v3132 = vlaneseq
        %v3133 = vshrl.u32 %v3132, 7
        %v3134 = vsub.s32 %v3131, %v3133
        %v3135 = vrot.slane %v3127, %v3134
        %v3137 = vunpack.c.l.s4 1983009808
        %v3138 = vunpack.c.0.s8 %v3137
        %v3139 = vlaneseq
        %v3140 = vshrl.u32 %v3139, 7
        %v3141 = vsub.s32 %v3138, %v3140
        %v3142 = vrot.slane %v3128, %v3141
        %v3143 = vcombine.low %v3135, %v3142
        %3144 = vrot.lane.b32.xlu0 %v3109, 64
        %v3145 = vpop.permute.xlu0 %3144
        %3146 = vrot.lane.b32.xlu0 %v3126, 64
        %v3147 = vpop.permute.xlu0 %3146
        %3148 = vrot.lane.b32.xlu0 %v3143, 64
        %v3149 = vpop.permute.xlu0 %3148
        %v3163 = vcombine.low %v2649, %v2658
        %v3165 = vunpack.c.l.s4 1983009808
        %v3166 = vunpack.c.0.s8 %v3165
        %v3167 = vlaneseq
        %v3168 = vshrl.u32 %v3167, 7
        %v3169 = vsub.s32 %v3166, %v3168
        %v3170 = vrot.slane %v3163, %v3169
        %v3171 = vcombine.low %v1854, %v3170
        %v3172 = vcombine.low %v2667, %v2676
        %v3173 = vcombine.low %v2685, %v2694
        %v3175 = vunpack.c.l.s4 1983009808
        %v3176 = vunpack.c.0.s8 %v3175
        %v3177 = vlaneseq
        %v3178 = vshrl.u32 %v3177, 7
        %v3179 = vsub.s32 %v3176, %v3178
        %v3180 = vrot.slane %v3172, %v3179
        %v3182 = vunpack.c.l.s4 1983009808
        %v3183 = vunpack.c.0.s8 %v3182
        %v3184 = vlaneseq
        %v3185 = vshrl.u32 %v3184, 7
        %v3186 = vsub.s32 %v3183, %v3185
        %v3187 = vrot.slane %v3173, %v3186
        %v3188 = vcombine.low %v3180, %v3187
        %v3189 = vcombine.low %v2703, %v2712
        %v3190 = vcombine.low %v2721, %v2730
        %v3192 = vunpack.c.l.s4 1983009808
        %v3193 = vunpack.c.0.s8 %v3192
        %v3194 = vlaneseq
        %v3195 = vshrl.u32 %v3194, 7
        %v3196 = vsub.s32 %v3193, %v3195
        %v3197 = vrot.slane %v3189, %v3196
        %v3199 = vunpack.c.l.s4 1983009808
        %v3200 = vunpack.c.0.s8 %v3199
        %v3201 = vlaneseq
        %v3202 = vshrl.u32 %v3201, 7
        %v3203 = vsub.s32 %v3200, %v3202
        %v3204 = vrot.slane %v3190, %v3203
        %v3205 = vcombine.low %v3197, %v3204
        %3206 = vrot.lane.b32.xlu0 %v3171, 96
        %v3207 = vpop.permute.xlu0 %3206
        %3208 = vrot.lane.b32.xlu0 %v3188, 96
        %v3209 = vpop.permute.xlu0 %3208
        %3210 = vrot.lane.b32.xlu0 %v3205, 96
        %v3211 = vpop.permute.xlu0 %3210
        %v3215 = vsel %vm1882, %v2749, %v2841
        %v3216 = vsel %vm1882, %v2766, %v2843
        %v3217 = vsel %vm1882, %v2783, %v2845
        %v3218 = vsel %vm1886, %v3215, %v2903
        %v3219 = vsel %vm1886, %v3216, %v2905
        %v3220 = vsel %vm1886, %v3217, %v2907
        %v3221 = vsel %vm1890, %v3218, %v2965
        %v3222 = vsel %vm1890, %v3219, %v2967
        %v3223 = vsel %vm1890, %v3220, %v2969
        %v3224 = vsel %vm1882, %v2991, %v3083
        %v3225 = vsel %vm1882, %v3008, %v3085
        %v3226 = vsel %vm1882, %v3025, %v3087
        %v3227 = vsel %vm1886, %v3224, %v3145
        %v3228 = vsel %vm1886, %v3225, %v3147
        %v3229 = vsel %vm1886, %v3226, %v3149
        %v3230 = vsel %vm1890, %v3227, %v3207
        %v3231 = vsel %vm1890, %v3228, %v3209
        %v3232 = vsel %vm1890, %v3229, %v3211
        %s3233 = scalar_lea.vmem %s2, 8
        %v3234 = vld [vmem:[%s3233] sm:$0xff]
        %v3236 = vsel %vm1904, %v3234, 0
        %3238 = vmatprep.subr.mxu0 %v3230
        %3239 = vmatpush1.msra.mxu0 %v3221
        %3240 = vmatprep.subr.mxu0 %v3231
        %3241 = vmatpush1.msra.mxu0 %v3222
        %3242 = vmatprep.subr.mxu0 %v3232
        %3243 = vmatpush1.msra.mxu0 %v3223
        %3244 = vmatprep.subr.mxu0 0.0
        %3245 = vmatpush1.msra.mxu0 0.0
        %3246 = vmatprep.subr.mxu0 0.0
        %3247 = vmatpush1.msra.mxu0 0.0
        %3248 = vmatprep.subr.mxu0 0.0
        %3249 = vmatpush1.msra.mxu0 0.0
        %3250 = vmatprep.subr.mxu0 0.0
        %3251 = vmatpush1.msra.mxu0 0.0
        %3252 = vmatprep.subr.mxu0 0.0
        %3253 = vmatpush1.msra.mxu0 0.0
        %3254 = vmatprep.subr.mxu0 0.0
        %3255 = vmatpush1.msra.mxu0 0.0
        %3256 = vmatprep.subr.mxu0 0.0
        %3257 = vmatpush1.msra.mxu0 0.0
        %3258 = vmatprep.subr.mxu0 0.0
        %3259 = vmatpush1.msra.mxu0 0.0
        %3260 = vmatprep.subr.mxu0 0.0
        %3261 = vmatpush1.msra.mxu0 0.0
        %3262 = vmatprep.subr.mxu0 0.0
        %3263 = vmatpush1.msra.mxu0 0.0
        %3264 = vmatprep.subr.mxu0 0.0
        %3265 = vmatpush1.msra.mxu0 0.0
        %3266 = vmatprep.subr.mxu0 0.0
        %3267 = vmatpush1.msra.mxu0 0.0
        %3268 = vmatprep.subr.mxu0 0.0
        %3269 = vmatpush1.msra.mxu0 0.0
        %3270 = vmatprep.subr.mxu0 0.0
        %3271 = vmatpush1.msra.mxu0 0.0
        %3272 = vmatprep.subr.mxu0 0.0
        %3273 = vmatpush1.msra.mxu0 0.0
        %3274 = vmatprep.subr.mxu0 0.0
        %3275 = vmatpush1.msra.mxu0 0.0
        %3276 = vmatprep.subr.mxu0 0.0
        %3277 = vmatpush1.msra.mxu0 0.0
        %3278 = vmatprep.subr.mxu0 0.0
        %3279 = vmatpush1.msra.mxu0 0.0
        %3280 = vmatprep.subr.mxu0 0.0
        %3281 = vmatpush1.msra.mxu0 0.0
        %3282 = vmatprep.subr.mxu0 0.0
        %3283 = vmatpush1.msra.mxu0 0.0
        %3284 = vmatprep.subr.mxu0 0.0
        %3285 = vmatpush1.msra.mxu0 0.0
        %3286 = vmatprep.subr.mxu0 0.0
        %3287 = vmatpush1.msra.mxu0 0.0
        %3288 = vmatprep.subr.mxu0 0.0
        %3289 = vmatpush1.msra.mxu0 0.0
        %3290 = vmatprep.subr.mxu0 0.0
        %3291 = vmatpush1.msra.mxu0 0.0
        %3292 = vmatprep.subr.mxu0 0.0
        %3293 = vmatpush1.msra.mxu0 0.0
        %3294 = vmatprep.subr.mxu0 0.0
        %3295 = vmatpush1.msra.mxu0 0.0
        %3296 = vmatprep.subr.mxu0 0.0
        %3297 = vmatpush1.msra.mxu0 0.0
        %3298 = vmatprep.subr.mxu0 0.0
        %3299 = vmatpush1.msra.mxu0 0.0
        %3300 = vmatprep.subr.mxu0 0.0
        %3301 = vmatpush1.msra.mxu0 0.0
        %3302 = vmatprep.mubr.f32.mxu0 0.0
        %3303 = vmatmul.mubr.f32.gmra.mrb[0].mxu0 %v3236
        %v3304 = vpop.f32.mrb[0].mxu0
        %v3305 = vadd.f32 0.0, %v3304
        %v3306 = vpop.f32.mrb[0].mxu0
        %v3307 = vadd.f32 0.0, %v3306
        %3308 = vdwg.mxu0
        %3310 = vrot.lane.b32.xlu0 %v1975, 96
        %v3311 = vpop.permute.xlu0 %3310
        %3313 = vrot.lane.b32.xlu0 %v1975, 64
        %v3314 = vpop.permute.xlu0 %3313
        %3316 = vrot.lane.b32.xlu0 %v1975, 32
        %v3317 = vpop.permute.xlu0 %3316
        %3320 = vrot.lane.b32.xlu0 %v1977, 96
        %v3321 = vpop.permute.xlu0 %3320
        %3323 = vrot.lane.b32.xlu0 %v1977, 64
        %v3324 = vpop.permute.xlu0 %3323
        %3326 = vrot.lane.b32.xlu0 %v1977, 32
        %v3327 = vpop.permute.xlu0 %3326
        %v3329 = vcombine.low %v1975, %v3314
        %v3330 = vcombine.high %v1975, %v3314
        %v3332 = vunpack.c.l.s4 1983009808
        %v3333 = vunpack.c.0.s8 %v3332
        %v3334 = vlaneseq
        %v3335 = vshrl.u32 %v3334, 7
        %v3336 = vsub.s32 %v3333, %v3335
        %v3337 = vrot.slane %v3329, %v3336
        %v3339 = vunpack.c.l.s4 1983009808
        %v3340 = vunpack.c.0.s8 %v3339
        %v3341 = vlaneseq
        %v3342 = vshrl.u32 %v3341, 7
        %v3343 = vsub.s32 %v3340, %v3342
        %v3344 = vrot.slane %v3330, %v3343
        %v3345 = vcombine.low %v3311, %v3317
        %v3346 = vcombine.high %v3311, %v3317
        %v3348 = vunpack.c.l.s4 1983009808
        %v3349 = vunpack.c.0.s8 %v3348
        %v3350 = vlaneseq
        %v3351 = vshrl.u32 %v3350, 7
        %v3352 = vsub.s32 %v3349, %v3351
        %v3353 = vrot.slane %v3345, %v3352
        %v3355 = vunpack.c.l.s4 1983009808
        %v3356 = vunpack.c.0.s8 %v3355
        %v3357 = vlaneseq
        %v3358 = vshrl.u32 %v3357, 7
        %v3359 = vsub.s32 %v3356, %v3358
        %v3360 = vrot.slane %v3346, %v3359
        %v3361 = vcombine.low %v1977, %v3324
        %v3362 = vcombine.high %v1977, %v3324
        %v3364 = vunpack.c.l.s4 1983009808
        %v3365 = vunpack.c.0.s8 %v3364
        %v3366 = vlaneseq
        %v3367 = vshrl.u32 %v3366, 7
        %v3368 = vsub.s32 %v3365, %v3367
        %v3369 = vrot.slane %v3361, %v3368
        %v3371 = vunpack.c.l.s4 1983009808
        %v3372 = vunpack.c.0.s8 %v3371
        %v3373 = vlaneseq
        %v3374 = vshrl.u32 %v3373, 7
        %v3375 = vsub.s32 %v3372, %v3374
        %v3376 = vrot.slane %v3362, %v3375
        %v3377 = vcombine.low %v3321, %v3327
        %v3378 = vcombine.high %v3321, %v3327
        %v3380 = vunpack.c.l.s4 1983009808
        %v3381 = vunpack.c.0.s8 %v3380
        %v3382 = vlaneseq
        %v3383 = vshrl.u32 %v3382, 7
        %v3384 = vsub.s32 %v3381, %v3383
        %v3385 = vrot.slane %v3377, %v3384
        %v3387 = vunpack.c.l.s4 1983009808
        %v3388 = vunpack.c.0.s8 %v3387
        %v3389 = vlaneseq
        %v3390 = vshrl.u32 %v3389, 7
        %v3391 = vsub.s32 %v3388, %v3390
        %v3392 = vrot.slane %v3378, %v3391
        %v3393 = vcombine.low %v3337, %v3353
        %v3394 = vcombine.high %v3337, %v3353
        %v3396 = vunpack.c.l.s4 1934713408
        %v3397 = vunpack.c.0.s8 %v3396
        %v3398 = vlaneseq
        %v3399 = vshrl.u32 %v3398, 7
        %v3400 = vsub.s32 %v3397, %v3399
        %v3401 = vrot.slane %v3393, %v3400
        %v3403 = vunpack.c.l.s4 1934713408
        %v3404 = vunpack.c.0.s8 %v3403
        %v3405 = vlaneseq
        %v3406 = vshrl.u32 %v3405, 7
        %v3407 = vsub.s32 %v3404, %v3406
        %v3408 = vrot.slane %v3394, %v3407
        %v3409 = vcombine.low %v3344, %v3360
        %v3410 = vcombine.high %v3344, %v3360
        %v3412 = vunpack.c.l.s4 1934713408
        %v3413 = vunpack.c.0.s8 %v3412
        %v3414 = vlaneseq
        %v3415 = vshrl.u32 %v3414, 7
        %v3416 = vsub.s32 %v3413, %v3415
        %v3417 = vrot.slane %v3409, %v3416
        %v3419 = vunpack.c.l.s4 1934713408
        %v3420 = vunpack.c.0.s8 %v3419
        %v3421 = vlaneseq
        %v3422 = vshrl.u32 %v3421, 7
        %v3423 = vsub.s32 %v3420, %v3422
        %v3424 = vrot.slane %v3410, %v3423
        %v3425 = vcombine.low %v3369, %v3385
        %v3426 = vcombine.high %v3369, %v3385
        %v3428 = vunpack.c.l.s4 1934713408
        %v3429 = vunpack.c.0.s8 %v3428
        %v3430 = vlaneseq
        %v3431 = vshrl.u32 %v3430, 7
        %v3432 = vsub.s32 %v3429, %v3431
        %v3433 = vrot.slane %v3425, %v3432
        %v3435 = vunpack.c.l.s4 1934713408
        %v3436 = vunpack.c.0.s8 %v3435
        %v3437 = vlaneseq
        %v3438 = vshrl.u32 %v3437, 7
        %v3439 = vsub.s32 %v3436, %v3438
        %v3440 = vrot.slane %v3426, %v3439
        %v3441 = vcombine.low %v3376, %v3392
        %v3442 = vcombine.high %v3376, %v3392
        %v3444 = vunpack.c.l.s4 1934713408
        %v3445 = vunpack.c.0.s8 %v3444
        %v3446 = vlaneseq
        %v3447 = vshrl.u32 %v3446, 7
        %v3448 = vsub.s32 %v3445, %v3447
        %v3449 = vrot.slane %v3441, %v3448
        %v3451 = vunpack.c.l.s4 1934713408
        %v3452 = vunpack.c.0.s8 %v3451
        %v3453 = vlaneseq
        %v3454 = vshrl.u32 %v3453, 7
        %v3455 = vsub.s32 %v3452, %v3454
        %v3456 = vrot.slane %v3442, %v3455
        %v3457 = vcombine.low %v3401, %v3433
        %v3458 = vcombine.high %v3401, %v3433
        %v3459 = vcombine.low %v3408, %v3440
        %v3460 = vcombine.high %v3408, %v3440
        %v3461 = vcombine.low %v3417, %v3449
        %v3462 = vcombine.high %v3417, %v3449
        %v3463 = vcombine.low %v3424, %v3456
        %v3464 = vcombine.high %v3424, %v3456
        %3466 = vrot.lane.b32.xlu0 %v3305, 96
        %v3467 = vpop.permute.xlu0 %3466
        %3469 = vrot.lane.b32.xlu0 %v3305, 64
        %v3470 = vpop.permute.xlu0 %3469
        %3472 = vrot.lane.b32.xlu0 %v3305, 32
        %v3473 = vpop.permute.xlu0 %3472
        %3476 = vrot.lane.b32.xlu0 %v3307, 96
        %v3477 = vpop.permute.xlu0 %3476
        %3479 = vrot.lane.b32.xlu0 %v3307, 64
        %v3480 = vpop.permute.xlu0 %3479
        %3482 = vrot.lane.b32.xlu0 %v3307, 32
        %v3483 = vpop.permute.xlu0 %3482
        %v3485 = vcombine.low %v3305, %v3470
        %v3486 = vcombine.high %v3305, %v3470
        %v3488 = vunpack.c.l.s4 1983009808
        %v3489 = vunpack.c.0.s8 %v3488
        %v3490 = vlaneseq
        %v3491 = vshrl.u32 %v3490, 7
        %v3492 = vsub.s32 %v3489, %v3491
        %v3493 = vrot.slane %v3485, %v3492
        %v3495 = vunpack.c.l.s4 1983009808
        %v3496 = vunpack.c.0.s8 %v3495
        %v3497 = vlaneseq
        %v3498 = vshrl.u32 %v3497, 7
        %v3499 = vsub.s32 %v3496, %v3498
        %v3500 = vrot.slane %v3486, %v3499
        %v3501 = vcombine.low %v3467, %v3473
        %v3502 = vcombine.high %v3467, %v3473
        %v3504 = vunpack.c.l.s4 1983009808
        %v3505 = vunpack.c.0.s8 %v3504
        %v3506 = vlaneseq
        %v3507 = vshrl.u32 %v3506, 7
        %v3508 = vsub.s32 %v3505, %v3507
        %v3509 = vrot.slane %v3501, %v3508
        %v3511 = vunpack.c.l.s4 1983009808
        %v3512 = vunpack.c.0.s8 %v3511
        %v3513 = vlaneseq
        %v3514 = vshrl.u32 %v3513, 7
        %v3515 = vsub.s32 %v3512, %v3514
        %v3516 = vrot.slane %v3502, %v3515
        %v3517 = vcombine.low %v3307, %v3480
        %v3518 = vcombine.high %v3307, %v3480
        %v3520 = vunpack.c.l.s4 1983009808
        %v3521 = vunpack.c.0.s8 %v3520
        %v3522 = vlaneseq
        %v3523 = vshrl.u32 %v3522, 7
        %v3524 = vsub.s32 %v3521, %v3523
        %v3525 = vrot.slane %v3517, %v3524
        %v3527 = vunpack.c.l.s4 1983009808
        %v3528 = vunpack.c.0.s8 %v3527
        %v3529 = vlaneseq
        %v3530 = vshrl.u32 %v3529, 7
        %v3531 = vsub.s32 %v3528, %v3530
        %v3532 = vrot.slane %v3518, %v3531
        %v3533 = vcombine.low %v3477, %v3483
        %v3534 = vcombine.high %v3477, %v3483
        %v3536 = vunpack.c.l.s4 1983009808
        %v3537 = vunpack.c.0.s8 %v3536
        %v3538 = vlaneseq
        %v3539 = vshrl.u32 %v3538, 7
        %v3540 = vsub.s32 %v3537, %v3539
        %v3541 = vrot.slane %v3533, %v3540
        %v3543 = vunpack.c.l.s4 1983009808
        %v3544 = vunpack.c.0.s8 %v3543
        %v3545 = vlaneseq
        %v3546 = vshrl.u32 %v3545, 7
        %v3547 = vsub.s32 %v3544, %v3546
        %v3548 = vrot.slane %v3534, %v3547
        %v3549 = vcombine.low %v3493, %v3509
        %v3550 = vcombine.high %v3493, %v3509
        %v3552 = vunpack.c.l.s4 1934713408
        %v3553 = vunpack.c.0.s8 %v3552
        %v3554 = vlaneseq
        %v3555 = vshrl.u32 %v3554, 7
        %v3556 = vsub.s32 %v3553, %v3555
        %v3557 = vrot.slane %v3549, %v3556
        %v3559 = vunpack.c.l.s4 1934713408
        %v3560 = vunpack.c.0.s8 %v3559
        %v3561 = vlaneseq
        %v3562 = vshrl.u32 %v3561, 7
        %v3563 = vsub.s32 %v3560, %v3562
        %v3564 = vrot.slane %v3550, %v3563
        %v3565 = vcombine.low %v3500, %v3516
        %v3566 = vcombine.high %v3500, %v3516
        %v3568 = vunpack.c.l.s4 1934713408
        %v3569 = vunpack.c.0.s8 %v3568
        %v3570 = vlaneseq
        %v3571 = vshrl.u32 %v3570, 7
        %v3572 = vsub.s32 %v3569, %v3571
        %v3573 = vrot.slane %v3565, %v3572
        %v3575 = vunpack.c.l.s4 1934713408
        %v3576 = vunpack.c.0.s8 %v3575
        %v3577 = vlaneseq
        %v3578 = vshrl.u32 %v3577, 7
        %v3579 = vsub.s32 %v3576, %v3578
        %v3580 = vrot.slane %v3566, %v3579
        %v3581 = vcombine.low %v3525, %v3541
        %v3582 = vcombine.high %v3525, %v3541
        %v3584 = vunpack.c.l.s4 1934713408
        %v3585 = vunpack.c.0.s8 %v3584
        %v3586 = vlaneseq
        %v3587 = vshrl.u32 %v3586, 7
        %v3588 = vsub.s32 %v3585, %v3587
        %v3589 = vrot.slane %v3581, %v3588
        %v3591 = vunpack.c.l.s4 1934713408
        %v3592 = vunpack.c.0.s8 %v3591
        %v3593 = vlaneseq
        %v3594 = vshrl.u32 %v3593, 7
        %v3595 = vsub.s32 %v3592, %v3594
        %v3596 = vrot.slane %v3582, %v3595
        %v3597 = vcombine.low %v3532, %v3548
        %v3598 = vcombine.high %v3532, %v3548
        %v3600 = vunpack.c.l.s4 1934713408
        %v3601 = vunpack.c.0.s8 %v3600
        %v3602 = vlaneseq
        %v3603 = vshrl.u32 %v3602, 7
        %v3604 = vsub.s32 %v3601, %v3603
        %v3605 = vrot.slane %v3597, %v3604
        %v3607 = vunpack.c.l.s4 1934713408
        %v3608 = vunpack.c.0.s8 %v3607
        %v3609 = vlaneseq
        %v3610 = vshrl.u32 %v3609, 7
        %v3611 = vsub.s32 %v3608, %v3610
        %v3612 = vrot.slane %v3598, %v3611
        %v3613 = vcombine.low %v3557, %v3589
        %v3614 = vcombine.high %v3557, %v3589
        %v3615 = vcombine.low %v3564, %v3596
        %v3616 = vcombine.high %v3564, %v3596
        %v3617 = vcombine.low %v3573, %v3605
        %v3618 = vcombine.high %v3573, %v3605
        %v3619 = vcombine.low %v3580, %v3612
        %v3620 = vcombine.high %v3580, %v3612
        %3629 = vrot.lane.b32.xlu0 %v3613, 32
        %v3630 = vpop.permute.xlu0 %3629
        %3631 = vrot.lane.b32.xlu0 %v3614, 32
        %v3632 = vpop.permute.xlu0 %3631
        %3633 = vrot.lane.b32.xlu0 %v3615, 32
        %v3634 = vpop.permute.xlu0 %3633
        %3635 = vrot.lane.b32.xlu0 %v3616, 32
        %v3636 = vpop.permute.xlu0 %3635
        %3637 = vrot.lane.b32.xlu0 %v3617, 32
        %v3638 = vpop.permute.xlu0 %3637
        %3639 = vrot.lane.b32.xlu0 %v3618, 32
        %v3640 = vpop.permute.xlu0 %3639
        %3641 = vrot.lane.b32.xlu0 %v3619, 32
        %v3642 = vpop.permute.xlu0 %3641
        %3643 = vrot.lane.b32.xlu0 %v3620, 32
        %v3644 = vpop.permute.xlu0 %3643
        %v3653 = vsel %vm1882, %v3457, %v3630
        %v3654 = vsel %vm1882, %v3458, %v3632
        %v3655 = vsel %vm1882, %v3459, %v3634
        %v3656 = vsel %vm1882, %v3460, %v3636
        %v3657 = vsel %vm1882, %v3461, %v3638
        %v3658 = vsel %vm1882, %v3462, %v3640
        %v3659 = vsel %vm1882, %v3463, %v3642
        %v3660 = vsel %vm1882, %v3464, %v3644
        %v3661 = vcombine.low %v3653, %v3655
        %v3662 = vcombine.high %v3653, %v3655
        %v3664 = vunpack.c.l.s4 1983009808
        %v3665 = vunpack.c.0.s8 %v3664
        %v3666 = vlaneseq
        %v3667 = vshrl.u32 %v3666, 7
        %v3668 = vsub.s32 %v3665, %v3667
        %v3669 = vrot.slane %v3661, %v3668
        %v3671 = vunpack.c.l.s4 1983009808
        %v3672 = vunpack.c.0.s8 %v3671
        %v3673 = vlaneseq
        %v3674 = vshrl.u32 %v3673, 7
        %v3675 = vsub.s32 %v3672, %v3674
        %v3676 = vrot.slane %v3662, %v3675
        %v3677 = vcombine.low %v3654, %v3656
        %v3678 = vcombine.high %v3654, %v3656
        %v3680 = vunpack.c.l.s4 1983009808
        %v3681 = vunpack.c.0.s8 %v3680
        %v3682 = vlaneseq
        %v3683 = vshrl.u32 %v3682, 7
        %v3684 = vsub.s32 %v3681, %v3683
        %v3685 = vrot.slane %v3677, %v3684
        %v3687 = vunpack.c.l.s4 1983009808
        %v3688 = vunpack.c.0.s8 %v3687
        %v3689 = vlaneseq
        %v3690 = vshrl.u32 %v3689, 7
        %v3691 = vsub.s32 %v3688, %v3690
        %v3692 = vrot.slane %v3678, %v3691
        %v3693 = vcombine.low %v3657, %v3659
        %v3694 = vcombine.high %v3657, %v3659
        %v3696 = vunpack.c.l.s4 1983009808
        %v3697 = vunpack.c.0.s8 %v3696
        %v3698 = vlaneseq
        %v3699 = vshrl.u32 %v3698, 7
        %v3700 = vsub.s32 %v3697, %v3699
        %v3701 = vrot.slane %v3693, %v3700
        %v3703 = vunpack.c.l.s4 1983009808
        %v3704 = vunpack.c.0.s8 %v3703
        %v3705 = vlaneseq
        %v3706 = vshrl.u32 %v3705, 7
        %v3707 = vsub.s32 %v3704, %v3706
        %v3708 = vrot.slane %v3694, %v3707
        %v3709 = vcombine.low %v3658, %v3660
        %v3710 = vcombine.high %v3658, %v3660
        %v3712 = vunpack.c.l.s4 1983009808
        %v3713 = vunpack.c.0.s8 %v3712
        %v3714 = vlaneseq
        %v3715 = vshrl.u32 %v3714, 7
        %v3716 = vsub.s32 %v3713, %v3715
        %v3717 = vrot.slane %v3709, %v3716
        %v3719 = vunpack.c.l.s4 1983009808
        %v3720 = vunpack.c.0.s8 %v3719
        %v3721 = vlaneseq
        %v3722 = vshrl.u32 %v3721, 7
        %v3723 = vsub.s32 %v3720, %v3722
        %v3724 = vrot.slane %v3710, %v3723
        %v3725 = vcombine.low %v3669, %v3685
        %v3726 = vcombine.high %v3669, %v3685
        %v3728 = vunpack.c.l.s4 1934713408
        %v3729 = vunpack.c.0.s8 %v3728
        %v3730 = vlaneseq
        %v3731 = vshrl.u32 %v3730, 7
        %v3732 = vsub.s32 %v3729, %v3731
        %v3733 = vrot.slane %v3725, %v3732
        %v3735 = vunpack.c.l.s4 1934713408
        %v3736 = vunpack.c.0.s8 %v3735
        %v3737 = vlaneseq
        %v3738 = vshrl.u32 %v3737, 7
        %v3739 = vsub.s32 %v3736, %v3738
        %v3740 = vrot.slane %v3726, %v3739
        %v3741 = vcombine.low %v3676, %v3692
        %v3742 = vcombine.high %v3676, %v3692
        %v3744 = vunpack.c.l.s4 1934713408
        %v3745 = vunpack.c.0.s8 %v3744
        %v3746 = vlaneseq
        %v3747 = vshrl.u32 %v3746, 7
        %v3748 = vsub.s32 %v3745, %v3747
        %v3749 = vrot.slane %v3741, %v3748
        %v3751 = vunpack.c.l.s4 1934713408
        %v3752 = vunpack.c.0.s8 %v3751
        %v3753 = vlaneseq
        %v3754 = vshrl.u32 %v3753, 7
        %v3755 = vsub.s32 %v3752, %v3754
        %v3756 = vrot.slane %v3742, %v3755
        %v3757 = vcombine.low %v3701, %v3717
        %v3758 = vcombine.high %v3701, %v3717
        %v3760 = vunpack.c.l.s4 1934713408
        %v3761 = vunpack.c.0.s8 %v3760
        %v3762 = vlaneseq
        %v3763 = vshrl.u32 %v3762, 7
        %v3764 = vsub.s32 %v3761, %v3763
        %v3765 = vrot.slane %v3757, %v3764
        %v3767 = vunpack.c.l.s4 1934713408
        %v3768 = vunpack.c.0.s8 %v3767
        %v3769 = vlaneseq
        %v3770 = vshrl.u32 %v3769, 7
        %v3771 = vsub.s32 %v3768, %v3770
        %v3772 = vrot.slane %v3758, %v3771
        %v3773 = vcombine.low %v3708, %v3724
        %v3774 = vcombine.high %v3708, %v3724
        %v3776 = vunpack.c.l.s4 1934713408
        %v3777 = vunpack.c.0.s8 %v3776
        %v3778 = vlaneseq
        %v3779 = vshrl.u32 %v3778, 7
        %v3780 = vsub.s32 %v3777, %v3779
        %v3781 = vrot.slane %v3773, %v3780
        %v3783 = vunpack.c.l.s4 1934713408
        %v3784 = vunpack.c.0.s8 %v3783
        %v3785 = vlaneseq
        %v3786 = vshrl.u32 %v3785, 7
        %v3787 = vsub.s32 %v3784, %v3786
        %v3788 = vrot.slane %v3774, %v3787
        %v3789 = vcombine.low %v3733, %v3765
        %v3790 = vcombine.high %v3733, %v3765
        %v3791 = vcombine.low %v3740, %v3772
        %v3792 = vcombine.high %v3740, %v3772
        %v3793 = vcombine.low %v3749, %v3781
        %v3794 = vcombine.high %v3749, %v3781
        %v3795 = vcombine.low %v3756, %v3788
        %v3796 = vcombine.high %v3756, %v3788
        %3798 = vrot.lane.b32.xlu0 %v3790, 64
        %v3799 = vpop.permute.xlu0 %3798
        %3802 = vrot.lane.b32.xlu0 %v3792, 64
        %v3803 = vpop.permute.xlu0 %3802
        %3806 = vrot.lane.b32.xlu0 %v3794, 64
        %v3807 = vpop.permute.xlu0 %3806
        %3810 = vrot.lane.b32.xlu0 %v3796, 64
        %v3811 = vpop.permute.xlu0 %3810
        %v3813 = vsel %vm1886, %v3789, %v3799
        %v3814 = vsel %vm1886, %v3791, %v3803
        %v3815 = vsel %vm1886, %v3793, %v3807
        %v3816 = vsel %vm1886, %v3795, %v3811
        %v3817 = vld [vmem:[%s3] sm:$0xff]
        %3819 = vset.pattern.permute.xlu0 0
        %3820 = vperm.xlu0 %3819, %v3817
        %v3821 = vpop.permute.xlu0 %3820
        %v3823 = vadd.f32 %v3813, %v3821
        %v3824 = vadd.f32 %v3814, %v3821
        %v3825 = vadd.f32 %v3815, %v3821
        %v3826 = vadd.f32 %v3816, %v3821
        %3827 = vst [vmem:[%s204] sm:$0xff] %v3823
        %3828 = vst [vmem:[%s204 + $0x8] sm:$0xff] %v3824
        %3829 = vst [vmem:[%s204 + $0x10] sm:$0xff] %v3825
        %3830 = vst [vmem:[%s204 + $0x18] sm:$0xff] %v3826
        %s3831 = sand.u32 %s129, 1
        %s3832 = scalar_lea.sflag [#allocation3], %s3831
        %s3833 = sand.u32 %s129, 1
        %s3834 = smul.addr %s3833, 32
        %s3835 = scalar_lea.vmem [#allocation2], %s3834
        // Predicated region
        $region37: #{tpu_custom_call.1} parent=35 // pred_check
          %p3836 = pneg %p139
        $region38: #{tpu_custom_call.1} parent=35 // pred_check_branch
          %3838 = sbr.rel (%p3836) target = $region40
        $region39: #{tpu_custom_call.1} parent=35 // pred_region
          %s3839 = smul.u32 4, %s23
          %s3841 = ssub.s32 512, 512
          %3842 = vsyncadd %s3832, %s3841
          %s3843 = smul.addr %s22, 8
          %s3844 = sadd.s32 %s3839, %s3843
          %s3845 = smul.addr %s3844, 128
          %s3846 = scalar_lea.hbm %s4, %s3845
          %s3848 = sshll.u32 %s3835, 4
          %s3849 = int_to_ptr.vmem [resolvable:$true] %s3848
          %3851 = dma.vmem_to_hbm [thread:$0]  %s3849, 512, %s3846, %s3832
        $region40: #{tpu_custom_call.1} parent=35 // pred_fallthru
          _
      $region36: #{tpu_custom_call.1} parent=5 // pred_fallthru
        _
      %p3852 = scmp.le.s32.totalorder 2, %s13
      // Predicated region
      $region41: #{tpu_custom_call.1} parent=5 // pred_check
        %p3853 = pneg %p3852
      $region42: #{tpu_custom_call.1} parent=5 // pred_check_branch
        %3855 = sbr.rel (%p3853) target = $region44
      $region43: #{tpu_custom_call.1} parent=5 // pred_region
        %s3856 = ssub.s32 %s13, 2
        // Predicated region
        $region45: #{tpu_custom_call.1} parent=43 // pred_check
          %p3857 = pneg %p145
        $region46: #{tpu_custom_call.1} parent=43 // pred_check_branch
          %3859 = sbr.rel (%p3857) target = $region48
        $region47: #{tpu_custom_call.1} parent=43 // pred_region
          %s3860 = sand.u32 %s130, 1
          %s3861 = scalar_lea.sflag [#allocation3], %s3860
          %s3862 = sand.u32 %s130, 1
          %s3863 = smul.addr %s3862, 32
          %s3864 = scalar_lea.vmem [#allocation2], %s3863
          %3865 = dma.done %s3861, 512
        $region48: #{tpu_custom_call.1} parent=43 // pred_fallthru
          _
      $region44: #{tpu_custom_call.1} parent=5 // pred_fallthru
        _
    $region6: #{tpu_custom_call.1} parent=1 // loop_footer
      %s17 = sadd.s32 1, %s13
    $region7: #{tpu_custom_call.1} parent=1 // loop_footer_branch
      %12 = sbr.rel target = $region3
    $region8: #{tpu_custom_call.1} parent=1 // loop_exit
      _
    %3866 = vsyncpa [#allocation3], 1
    %s3867 = scalar_lea.sflag [#allocation3], 1
    %3868 = vsyncpa %s3867, 1

</llo_original>
